<compile_context>
chip_gen: v5e
topology: v5e:2x2
jax: 0.10.0
libtpu: 0.0.40
codegen_flags: <defaults>
</compile_context>

<pallas_src>
import functools

import jax
import jax.numpy as jnp
from jax.experimental import pallas as pl
from jax.experimental.pallas import tpu as pltpu

Z_DIM = 64
HIDDEN = 128
LANE = 128
TB_ALIGN = 16          # batch-tile granule: bf16 sublane packing is (16, 128)


def _round_up(x, m):
    return ((x + m - 1) // m) * m


def _gelu_exact(x):
    # nn.GELU() default (approximate='none'): 0.5*x*(1+erf(x/sqrt(2)))
    return 0.5 * x * (1.0 + jax.lax.erf(x * (1.0 / jnp.sqrt(2.0))))


def _vmem_capacity_bytes():
    try:
        return int(pltpu.get_tpu_info().vmem_capacity_bytes)
    except Exception:
        return 64 * 1024 * 1024          # conservative (v7x) fallback


def _activation_tile_bytes(tb, f_pad):
    # double-buffered in/out tiles: x + recon (bf16, f_pad lanes),
    # eps (bf16, Z_DIM lanes), enc (f32, 2*Z_DIM lanes)
    return 2 * (tb * f_pad * 2 + tb * Z_DIM * 2
                + tb * f_pad * 2 + tb * 2 * Z_DIM * 4)


def vae_kernel(
    x_ref, eps_ref,
    we1_ref, be1_ref, we2_ref, be2_ref, we3_ref, be3_ref,
    wd1_ref, bd1_ref, wd2_ref, bd2_ref, wd3_ref, bd3_ref,
    recon_ref, enc_ref,
):
    f32 = jnp.float32
    bf16 = jnp.bfloat16

    x = x_ref[...]                       # already bf16 (half-width DMA)

    # ---- encoder: Linear -> GELU -> Linear -> GELU -> Linear
    #      (bf16 MXU operands, f32 accumulation; bias add + GELU in f32)
    h = _gelu_exact(
        jnp.dot(x, we1_ref[...], preferred_element_type=f32) + be1_ref[...])
    h = _gelu_exact(
        jnp.dot(h.astype(bf16), we2_ref[...], preferred_element_type=f32) + be2_ref[...])
    enc = jnp.dot(h.astype(bf16), we3_ref[...], preferred_element_type=f32) + be3_ref[...]

    # One lane-dense (TB, 2*Z_DIM)=(TB, 128) f32 store; mu/log_var sliced outside.
    enc_ref[...] = enc

    # view(-1, 2, z_dim): columns [0:Z] -> mu, [Z:2Z] -> log_var (stays in vregs)
    mu = enc[:, :Z_DIM]
    log_var = enc[:, Z_DIM:]

    # ---- reparameterize: z = mu + eps * exp(0.5 * log_var)   (f32 VPU/EUP)
    std = jnp.exp(0.5 * log_var)
    z = mu + eps_ref[...].astype(f32) * std

    # ---- decoder: Linear -> GELU -> Linear -> GELU -> Linear
    h = _gelu_exact(
        jnp.dot(z.astype(bf16), wd1_ref[...], preferred_element_type=f32) + bd1_ref[...])
    h = _gelu_exact(
        jnp.dot(h.astype(bf16), wd2_ref[...], preferred_element_type=f32) + bd2_ref[...])
    recon = jnp.dot(h.astype(bf16), wd3_ref[...], preferred_element_type=f32) + bd3_ref[...]

    recon_ref[...] = recon.astype(recon_ref.dtype)   # bf16 writeback (half HBM bytes)


def prepare_params(params, feature_dim):
    """One-time transform: cast weights to bf16, lane-pad the feature-facing
    layers to a multiple of 128. Call once; reuse the result for every forward."""
    (we1, be1, we2, be2, we3, be3, wd1, bd1, wd2, bd2, wd3, bd3) = params
    f_pad = _round_up(feature_dim, LANE)
    bf16 = jnp.bfloat16

    we1_p = jnp.zeros((f_pad, HIDDEN), bf16).at[:feature_dim].set(we1.astype(bf16))
    wd3_p = jnp.zeros((HIDDEN, f_pad), bf16).at[:, :feature_dim].set(wd3.astype(bf16))
    bd3_p = jnp.zeros((1, f_pad), jnp.float32).at[:, :feature_dim].set(bd3)

    return (
        we1_p, be1, we2.astype(bf16), be2, we3.astype(bf16), be3,
        wd1.astype(bf16), bd1, wd2.astype(bf16), bd2, wd3_p, bd3_p,
    )


@functools.partial(jax.jit, static_argnames=("feature_dim", "block_batch"))
def vae_forward(x, eps, prepped, feature_dim, block_batch=512):
    B = x.shape[0]
    f_pad = _round_up(feature_dim, LANE)
    bf16 = jnp.bfloat16

    weight_bytes = sum(int(w.size) * w.dtype.itemsize for w in prepped)

    # ---- batch-tile selection against the actual VMEM capacity --------------
    vmem_cap = _vmem_capacity_bytes()                       # 64 MiB v7x, 128 MiB v5e/v6e
    usage_budget = min(int(0.70 * vmem_cap), 96 * 1024 * 1024)

    tb = _round_up(min(block_batch, max(B, TB_ALIGN)), TB_ALIGN)
    # resident weights are double-buffered by the default pipeline: count them twice
    while tb > TB_ALIGN and (2 * weight_bytes + _activation_tile_bytes(tb, f_pad)
                             > usage_budget):
        tb = _round_up(tb // 2, TB_ALIGN)
    # keep >= 2 grid steps so the "parallel" batch axis can use both TCs on v7x
    if B > TB_ALIGN and _round_up(B, tb) // tb < 2:
        tb = _round_up(-(-B // 2), TB_ALIGN)
    b_pad = _round_up(B, tb)
    grid = (b_pad // tb,)
    vmem_limit = min(vmem_cap, usage_budget + 8 * 1024 * 1024)

    # ---- inputs: bf16 DMA; skip padding copies when already aligned ---------
    need_fpad = f_pad != feature_dim
    need_bpad = b_pad != B

    if need_fpad or need_bpad:
        x_in = jnp.zeros((b_pad, f_pad), bf16).at[:B, :feature_dim].set(x.astype(bf16))
    else:
        x_in = x.astype(bf16)
    if need_bpad:
        eps_in = jnp.zeros((b_pad, Z_DIM), bf16).at[:B].set(eps.astype(bf16))
    else:
        eps_in = eps.astype(bf16)

    def resident(a):
        # small weight/bias: whole array as one block, VMEM-resident across tiles
        return pl.BlockSpec(a.shape, lambda i: (0,) * a.ndim)

    in_specs = [
        pl.BlockSpec((tb, f_pad), lambda i: (i, 0)),     # x tile (bf16)
        pl.BlockSpec((tb, Z_DIM), lambda i: (i, 0)),     # eps tile (bf16)
    ] + [resident(a) for a in prepped]

    out_specs = [
        pl.BlockSpec((tb, f_pad), lambda i: (i, 0)),         # recon (bf16, lane-dense)
        pl.BlockSpec((tb, 2 * Z_DIM), lambda i: (i, 0)),     # enc = [mu | log_var] f32
    ]
    out_shape = [
        jax.ShapeDtypeStruct((b_pad, f_pad), jnp.bfloat16),
        jax.ShapeDtypeStruct((b_pad, 2 * Z_DIM), jnp.float32),
    ]

    flops = 2 * b_pad * (
        f_pad * HIDDEN + HIDDEN * HIDDEN + HIDDEN * 2 * Z_DIM
        + Z_DIM * HIDDEN + HIDDEN * HIDDEN + HIDDEN * f_pad
    )
    transcendentals = b_pad * (4 * HIDDEN + Z_DIM)   # 4 GELU(erf) layers + exp
    bytes_accessed = (
        b_pad * f_pad * 2 + b_pad * Z_DIM * 2        # x, eps (bf16)
        + weight_bytes
        + b_pad * f_pad * 2                          # recon (bf16)
        + b_pad * 2 * Z_DIM * 4                      # enc (f32)
    )

    recon_p, enc_p = pl.pallas_call(
        vae_kernel,
        grid=grid,
        in_specs=in_specs,
        out_specs=out_specs,
        out_shape=out_shape,
        compiler_params=pltpu.CompilerParams(
            dimension_semantics=("parallel",),
            vmem_limit_bytes=int(vmem_limit),
        ),
        cost_estimate=pl.CostEstimate(
            flops=flops,
            transcendentals=transcendentals,
            bytes_accessed=bytes_accessed,
        ),
    )(x_in, eps_in, *prepped)

    recon = recon_p
    if need_fpad or need_bpad:
        recon = recon[:B, :feature_dim]
    recon = recon.astype(jnp.float32)      # public API stays f32 (matches module)
    mu = enc_p[:B, :Z_DIM]
    log_var = enc_p[:B, Z_DIM:]
    return recon, mu, log_var


def init_params(key, feature_dim):
    """Deterministic synthetic init. Weights are [in, out], biases [1, out]."""
    ks = jax.random.split(key, 12)
    s = 0.1

    def w(k, i, o):
        return (s * jax.random.normal(k, (i, o))).astype(jnp.float32)

    def b(k, o):
        return (s * jax.random.normal(k, (1, o))).astype(jnp.float32)

    we1 = w(ks[0], feature_dim, HIDDEN); be1 = b(ks[1], HIDDEN)
    we2 = w(ks[2], HIDDEN, HIDDEN);      be2 = b(ks[3], HIDDEN)
    we3 = w(ks[4], HIDDEN, 2 * Z_DIM);   be3 = b(ks[5], 2 * Z_DIM)
    wd1 = w(ks[6], Z_DIM, HIDDEN);       bd1 = b(ks[7], HIDDEN)
    wd2 = w(ks[8], HIDDEN, HIDDEN);      bd2 = b(ks[9], HIDDEN)
    wd3 = w(ks[10], HIDDEN, feature_dim); bd3 = b(ks[11], feature_dim)
    return (we1, be1, we2, be2, we3, be3, wd1, bd1, wd2, bd2, wd3, bd3)


def reference_forward(x, eps, params):
    """Pure-JAX reference with matching bf16-matmul / f32-accumulate numerics."""
    (we1, be1, we2, be2, we3, be3, wd1, bd1, wd2, bd2, wd3, bd3) = params
    bf16, f32 = jnp.bfloat16, jnp.float32
    g = lambda v: 0.5 * v * (1.0 + jax.lax.erf(v / jnp.sqrt(2.0)))
    lin = lambda a, w, b: jnp.dot(a.astype(bf16), w.astype(bf16),
                                  preferred_element_type=f32) + b
    h = g(lin(x, we1, be1))
    h = g(lin(h, we2, be2))
    enc = lin(h, we3, be3)
    mu, log_var = enc[:, :Z_DIM], enc[:, Z_DIM:]
    z = mu + eps.astype(bf16).astype(f32) * jnp.exp(0.5 * log_var)
    h = g(lin(z, wd1, bd1))
    h = g(lin(h, wd2, bd2))
    recon = lin(h, wd3, bd3)
    return recon, mu, log_var


if __name__ == "__main__":
    feature_dim = 32
    batch = 32          # small; yields a 2-step grid (tb=16) -> exercises pipelining

    key = jax.random.PRNGKey(0)
    k_x, k_eps, k_params = jax.random.split(key, 3)

    x = jax.random.normal(k_x, (batch, feature_dim), dtype=jnp.float32)
    eps = jax.random.normal(k_eps, (batch, Z_DIM), dtype=jnp.float32)
    params = init_params(k_params, feature_dim)
    prepped = prepare_params(params, feature_dim)     # one-time weight prep

    recon, mu, log_var = vae_forward(x, eps, prepped, feature_dim=feature_dim)
    jax.block_until_ready((recon, mu, log_var))

    # sanity check against pure-JAX reference (same bf16-matmul numerics;
    # recon tolerance covers the bf16 writeback)
    r_ref, mu_ref, lv_ref = reference_forward(x, eps, params)
    assert recon.shape == (batch, feature_dim)
    assert mu.shape == (batch, Z_DIM) and log_var.shape == (batch, Z_DIM)
    assert jnp.allclose(recon, r_ref, atol=1e-2, rtol=1e-2)
    assert jnp.allclose(mu, mu_ref, atol=1e-2, rtol=1e-2)
    assert jnp.allclose(log_var, lv_ref, atol=1e-2, rtol=1e-2)

    print("KERNEL_OK")
</pallas_src>

<mosaic_0001>
module attributes {stable_mosaic.version = 11 : i64} {
  func.func @vae_kernel(%arg0: i32, %arg1: memref<16x128xbf16, #tpu.memory_space<vmem>>, %arg2: memref<16x64xbf16, #tpu.memory_space<vmem>>, %arg3: memref<128x128xbf16, #tpu.memory_space<vmem>>, %arg4: memref<1x128xf32, #tpu.memory_space<vmem>>, %arg5: memref<128x128xbf16, #tpu.memory_space<vmem>>, %arg6: memref<1x128xf32, #tpu.memory_space<vmem>>, %arg7: memref<128x128xbf16, #tpu.memory_space<vmem>>, %arg8: memref<1x128xf32, #tpu.memory_space<vmem>>, %arg9: memref<64x128xbf16, #tpu.memory_space<vmem>>, %arg10: memref<1x128xf32, #tpu.memory_space<vmem>>, %arg11: memref<128x128xbf16, #tpu.memory_space<vmem>>, %arg12: memref<1x128xf32, #tpu.memory_space<vmem>>, %arg13: memref<128x128xbf16, #tpu.memory_space<vmem>>, %arg14: memref<1x128xf32, #tpu.memory_space<vmem>>, %arg15: memref<16x128xbf16, #tpu.memory_space<vmem>>, %arg16: memref<16x128xf32, #tpu.memory_space<vmem>>) attributes {dimension_semantics = [#tpu.dimension_semantics<parallel>], iteration_bounds = array<i64: 2>, scalar_prefetch = 0 : i64, scratch_operands = 0 : i64, tpu.core_type = #tpu.core_type<tc>, window_params = [{transform_indices = @transform_0, window_bounds = array<i64: 16, 128>}, {transform_indices = @transform_1, window_bounds = array<i64: 16, 64>}, {pipeline_mode = #tpu.pipeline_mode<synchronous>, transform_indices = @transform_2, window_bounds = array<i64: 128, 128>}, {pipeline_mode = #tpu.pipeline_mode<synchronous>, transform_indices = @transform_3, window_bounds = array<i64: 1, 128>}, {pipeline_mode = #tpu.pipeline_mode<synchronous>, transform_indices = @transform_4, window_bounds = array<i64: 128, 128>}, {pipeline_mode = #tpu.pipeline_mode<synchronous>, transform_indices = @transform_5, window_bounds = array<i64: 1, 128>}, {pipeline_mode = #tpu.pipeline_mode<synchronous>, transform_indices = @transform_6, window_bounds = array<i64: 128, 128>}, {pipeline_mode = #tpu.pipeline_mode<synchronous>, transform_indices = @transform_7, window_bounds = array<i64: 1, 128>}, {pipeline_mode = #tpu.pipeline_mode<synchronous>, transform_indices = @transform_8, window_bounds = array<i64: 64, 128>}, {pipeline_mode = #tpu.pipeline_mode<synchronous>, transform_indices = @transform_9, window_bounds = array<i64: 1, 128>}, {pipeline_mode = #tpu.pipeline_mode<synchronous>, transform_indices = @transform_10, window_bounds = array<i64: 128, 128>}, {pipeline_mode = #tpu.pipeline_mode<synchronous>, transform_indices = @transform_11, window_bounds = array<i64: 1, 128>}, {pipeline_mode = #tpu.pipeline_mode<synchronous>, transform_indices = @transform_12, window_bounds = array<i64: 128, 128>}, {pipeline_mode = #tpu.pipeline_mode<synchronous>, transform_indices = @transform_13, window_bounds = array<i64: 1, 128>}, {transform_indices = @transform_14, window_bounds = array<i64: 16, 128>}, {transform_indices = @transform_15, window_bounds = array<i64: 16, 128>}]} {
    %c0 = arith.constant 0 : index
    %c0_0 = arith.constant 0 : index
    %0 = vector.load %arg1[%c0, %c0_0] : memref<16x128xbf16, #tpu.memory_space<vmem>>, vector<16x128xbf16>
    %c0_1 = arith.constant 0 : index
    %c0_2 = arith.constant 0 : index
    %1 = vector.load %arg3[%c0_1, %c0_2] : memref<128x128xbf16, #tpu.memory_space<vmem>>, vector<128x128xbf16>
    %cst = arith.constant dense<0.000000e+00> : vector<16x128xf32>
    %2 = tpu.matmul %0, %1, %cst {dimension_numbers = #tpu.dot_dimension_numbers<[1], [0], [0], [1], [0, 0, 1, 1], [], []>} : vector<16x128xbf16>, vector<128x128xbf16>, vector<16x128xf32> -> vector<16x128xf32>
    %c0_3 = arith.constant 0 : index
    %c0_4 = arith.constant 0 : index
    %3 = vector.load %arg4[%c0_3, %c0_4] : memref<1x128xf32, #tpu.memory_space<vmem>>, vector<1x128xf32>
    %4 = vector.broadcast %3 : vector<1x128xf32> to vector<16x128xf32>
    %5 = arith.addf %2, %4 : vector<16x128xf32>
    %cst_5 = arith.constant 5.000000e-01 : f32
    %6 = vector.broadcast %cst_5 : f32 to vector<16x128xf32>
    %7 = arith.mulf %6, %5 : vector<16x128xf32>
    %cst_6 = arith.constant 2.000000e+00 : f32
    %8 = math.sqrt %cst_6 : f32
    %cst_7 = arith.constant 1.000000e+00 : f32
    %9 = arith.divf %cst_7, %8 : f32
    %10 = vector.broadcast %9 : f32 to vector<16x128xf32>
    %11 = arith.mulf %5, %10 : vector<16x128xf32>
    %12 = math.erf %11 : vector<16x128xf32>
    %cst_8 = arith.constant 1.000000e+00 : f32
    %13 = vector.broadcast %cst_8 : f32 to vector<16x128xf32>
    %14 = arith.addf %13, %12 : vector<16x128xf32>
    %15 = arith.mulf %7, %14 : vector<16x128xf32>
    %16 = arith.truncf %15 : vector<16x128xf32> to vector<16x128xbf16>
    %c0_9 = arith.constant 0 : index
    %c0_10 = arith.constant 0 : index
    %17 = vector.load %arg5[%c0_9, %c0_10] : memref<128x128xbf16, #tpu.memory_space<vmem>>, vector<128x128xbf16>
    %cst_11 = arith.constant dense<0.000000e+00> : vector<16x128xf32>
    %18 = tpu.matmul %16, %17, %cst_11 {dimension_numbers = #tpu.dot_dimension_numbers<[1], [0], [0], [1], [0, 0, 1, 1], [], []>} : vector<16x128xbf16>, vector<128x128xbf16>, vector<16x128xf32> -> vector<16x128xf32>
    %c0_12 = arith.constant 0 : index
    %c0_13 = arith.constant 0 : index
    %19 = vector.load %arg6[%c0_12, %c0_13] : memref<1x128xf32, #tpu.memory_space<vmem>>, vector<1x128xf32>
    %20 = vector.broadcast %19 : vector<1x128xf32> to vector<16x128xf32>
    %21 = arith.addf %18, %20 : vector<16x128xf32>
    %cst_14 = arith.constant 5.000000e-01 : f32
    %22 = vector.broadcast %cst_14 : f32 to vector<16x128xf32>
    %23 = arith.mulf %22, %21 : vector<16x128xf32>
    %cst_15 = arith.constant 2.000000e+00 : f32
    %24 = math.sqrt %cst_15 : f32
    %cst_16 = arith.constant 1.000000e+00 : f32
    %25 = arith.divf %cst_16, %24 : f32
    %26 = vector.broadcast %25 : f32 to vector<16x128xf32>
    %27 = arith.mulf %21, %26 : vector<16x128xf32>
    %28 = math.erf %27 : vector<16x128xf32>
    %cst_17 = arith.constant 1.000000e+00 : f32
    %29 = vector.broadcast %cst_17 : f32 to vector<16x128xf32>
    %30 = arith.addf %29, %28 : vector<16x128xf32>
    %31 = arith.mulf %23, %30 : vector<16x128xf32>
    %32 = arith.truncf %31 : vector<16x128xf32> to vector<16x128xbf16>
    %c0_18 = arith.constant 0 : index
    %c0_19 = arith.constant 0 : index
    %33 = vector.load %arg7[%c0_18, %c0_19] : memref<128x128xbf16, #tpu.memory_space<vmem>>, vector<128x128xbf16>
    %cst_20 = arith.constant dense<0.000000e+00> : vector<16x128xf32>
    %34 = tpu.matmul %32, %33, %cst_20 {dimension_numbers = #tpu.dot_dimension_numbers<[1], [0], [0], [1], [0, 0, 1, 1], [], []>} : vector<16x128xbf16>, vector<128x128xbf16>, vector<16x128xf32> -> vector<16x128xf32>
    %c0_21 = arith.constant 0 : index
    %c0_22 = arith.constant 0 : index
    %35 = vector.load %arg8[%c0_21, %c0_22] : memref<1x128xf32, #tpu.memory_space<vmem>>, vector<1x128xf32>
    %36 = vector.broadcast %35 : vector<1x128xf32> to vector<16x128xf32>
    %37 = arith.addf %34, %36 : vector<16x128xf32>
    %c0_23 = arith.constant 0 : index
    %c0_24 = arith.constant 0 : index
    %38 = vector.load %arg16[%c0_23, %c0_24] : memref<16x128xf32, #tpu.memory_space<vmem>>, vector<16x128xf32>
    tpu.vector_store %arg16[%c0_23, %c0_24], %37 {strides = array<i32>} : memref<16x128xf32, #tpu.memory_space<vmem>>, vector<16x128xf32>,
    %39 = vector.extract_strided_slice %37 {offsets = [0, 0], sizes = [16, 64], strides = [1, 1]} : vector<16x128xf32> to vector<16x64xf32>
    %40 = vector.extract_strided_slice %37 {offsets = [0, 64], sizes = [16, 64], strides = [1, 1]} : vector<16x128xf32> to vector<16x64xf32>
    %cst_25 = arith.constant 5.000000e-01 : f32
    %41 = vector.broadcast %cst_25 : f32 to vector<16x64xf32>
    %42 = arith.mulf %41, %40 : vector<16x64xf32>
    %43 = math.exp %42 : vector<16x64xf32>
    %c0_26 = arith.constant 0 : index
    %c0_27 = arith.constant 0 : index
    %44 = vector.load %arg2[%c0_26, %c0_27] : memref<16x64xbf16, #tpu.memory_space<vmem>>, vector<16x64xbf16>
    %45 = arith.extf %44 : vector<16x64xbf16> to vector<16x64xf32>
    %46 = arith.mulf %45, %43 : vector<16x64xf32>
    %47 = arith.addf %39, %46 : vector<16x64xf32>
    %48 = arith.truncf %47 : vector<16x64xf32> to vector<16x64xbf16>
    %c0_28 = arith.constant 0 : index
    %c0_29 = arith.constant 0 : index
    %49 = vector.load %arg9[%c0_28, %c0_29] : memref<64x128xbf16, #tpu.memory_space<vmem>>, vector<64x128xbf16>
    %cst_30 = arith.constant dense<0.000000e+00> : vector<16x128xf32>
    %50 = tpu.matmul %48, %49, %cst_30 {dimension_numbers = #tpu.dot_dimension_numbers<[1], [0], [0], [1], [0, 0, 1, 1], [], []>} : vector<16x64xbf16>, vector<64x128xbf16>, vector<16x128xf32> -> vector<16x128xf32>
    %c0_31 = arith.constant 0 : index
    %c0_32 = arith.constant 0 : index
    %51 = vector.load %arg10[%c0_31, %c0_32] : memref<1x128xf32, #tpu.memory_space<vmem>>, vector<1x128xf32>
    %52 = vector.broadcast %51 : vector<1x128xf32> to vector<16x128xf32>
    %53 = arith.addf %50, %52 : vector<16x128xf32>
    %cst_33 = arith.constant 5.000000e-01 : f32
    %54 = vector.broadcast %cst_33 : f32 to vector<16x128xf32>
    %55 = arith.mulf %54, %53 : vector<16x128xf32>
    %cst_34 = arith.constant 2.000000e+00 : f32
    %56 = math.sqrt %cst_34 : f32
    %cst_35 = arith.constant 1.000000e+00 : f32
    %57 = arith.divf %cst_35, %56 : f32
    %58 = vector.broadcast %57 : f32 to vector<16x128xf32>
    %59 = arith.mulf %53, %58 : vector<16x128xf32>
    %60 = math.erf %59 : vector<16x128xf32>
    %cst_36 = arith.constant 1.000000e+00 : f32
    %61 = vector.broadcast %cst_36 : f32 to vector<16x128xf32>
    %62 = arith.addf %61, %60 : vector<16x128xf32>
    %63 = arith.mulf %55, %62 : vector<16x128xf32>
    %64 = arith.truncf %63 : vector<16x128xf32> to vector<16x128xbf16>
    %c0_37 = arith.constant 0 : index
    %c0_38 = arith.constant 0 : index
    %65 = vector.load %arg11[%c0_37, %c0_38] : memref<128x128xbf16, #tpu.memory_space<vmem>>, vector<128x128xbf16>
    %cst_39 = arith.constant dense<0.000000e+00> : vector<16x128xf32>
    %66 = tpu.matmul %64, %65, %cst_39 {dimension_numbers = #tpu.dot_dimension_numbers<[1], [0], [0], [1], [0, 0, 1, 1], [], []>} : vector<16x128xbf16>, vector<128x128xbf16>, vector<16x128xf32> -> vector<16x128xf32>
    %c0_40 = arith.constant 0 : index
    %c0_41 = arith.constant 0 : index
    %67 = vector.load %arg12[%c0_40, %c0_41] : memref<1x128xf32, #tpu.memory_space<vmem>>, vector<1x128xf32>
    %68 = vector.broadcast %67 : vector<1x128xf32> to vector<16x128xf32>
    %69 = arith.addf %66, %68 : vector<16x128xf32>
    %cst_42 = arith.constant 5.000000e-01 : f32
    %70 = vector.broadcast %cst_42 : f32 to vector<16x128xf32>
    %71 = arith.mulf %70, %69 : vector<16x128xf32>
    %cst_43 = arith.constant 2.000000e+00 : f32
    %72 = math.sqrt %cst_43 : f32
    %cst_44 = arith.constant 1.000000e+00 : f32
    %73 = arith.divf %cst_44, %72 : f32
    %74 = vector.broadcast %73 : f32 to vector<16x128xf32>
    %75 = arith.mulf %69, %74 : vector<16x128xf32>
    %76 = math.erf %75 : vector<16x128xf32>
    %cst_45 = arith.constant 1.000000e+00 : f32
    %77 = vector.broadcast %cst_45 : f32 to vector<16x128xf32>
    %78 = arith.addf %77, %76 : vector<16x128xf32>
    %79 = arith.mulf %71, %78 : vector<16x128xf32>
    %80 = arith.truncf %79 : vector<16x128xf32> to vector<16x128xbf16>
    %c0_46 = arith.constant 0 : index
    %c0_47 = arith.constant 0 : index
    %81 = vector.load %arg13[%c0_46, %c0_47] : memref<128x128xbf16, #tpu.memory_space<vmem>>, vector<128x128xbf16>
    %cst_48 = arith.constant dense<0.000000e+00> : vector<16x128xf32>
    %82 = tpu.matmul %80, %81, %cst_48 {dimension_numbers = #tpu.dot_dimension_numbers<[1], [0], [0], [1], [0, 0, 1, 1], [], []>} : vector<16x128xbf16>, vector<128x128xbf16>, vector<16x128xf32> -> vector<16x128xf32>
    %c0_49 = arith.constant 0 : index
    %c0_50 = arith.constant 0 : index
    %83 = vector.load %arg14[%c0_49, %c0_50] : memref<1x128xf32, #tpu.memory_space<vmem>>, vector<1x128xf32>
    %84 = vector.broadcast %83 : vector<1x128xf32> to vector<16x128xf32>
    %85 = arith.addf %82, %84 : vector<16x128xf32>
    %86 = arith.truncf %85 : vector<16x128xf32> to vector<16x128xbf16>
    %c0_51 = arith.constant 0 : index
    %c0_52 = arith.constant 0 : index
    %87 = vector.load %arg15[%c0_51, %c0_52] : memref<16x128xbf16, #tpu.memory_space<vmem>>, vector<16x128xbf16>
    tpu.vector_store %arg15[%c0_51, %c0_52], %86 {strides = array<i32>} : memref<16x128xbf16, #tpu.memory_space<vmem>>, vector<16x128xbf16>,
    return
  }
  func.func @transform_0(%arg0: i32) -> (i32, i32) {
    %c0_i32 = arith.constant 0 : i32
    %c0_i32_0 = arith.constant 0 : i32
    return %arg0, %c0_i32 : i32, i32
  }
  func.func @transform_1(%arg0: i32) -> (i32, i32) {
    %c0_i32 = arith.constant 0 : i32
    %c0_i32_0 = arith.constant 0 : i32
    return %arg0, %c0_i32 : i32, i32
  }
  func.func @transform_2(%arg0: i32) -> (i32, i32) {
    %c0_i32 = arith.constant 0 : i32
    %c0_i32_0 = arith.constant 0 : i32
    %c0_i32_1 = arith.constant 0 : i32
    return %c0_i32, %c0_i32_0 : i32, i32
  }
  func.func @transform_3(%arg0: i32) -> (i32, i32) {
    %c0_i32 = arith.constant 0 : i32
    %c0_i32_0 = arith.constant 0 : i32
    %c0_i32_1 = arith.constant 0 : i32
    return %c0_i32, %c0_i32_0 : i32, i32
  }
  func.func @transform_4(%arg0: i32) -> (i32, i32) {
    %c0_i32 = arith.constant 0 : i32
    %c0_i32_0 = arith.constant 0 : i32
    %c0_i32_1 = arith.constant 0 : i32
    return %c0_i32, %c0_i32_0 : i32, i32
  }
  func.func @transform_5(%arg0: i32) -> (i32, i32) {
    %c0_i32 = arith.constant 0 : i32
    %c0_i32_0 = arith.constant 0 : i32
    %c0_i32_1 = arith.constant 0 : i32
    return %c0_i32, %c0_i32_0 : i32, i32
  }
  func.func @transform_6(%arg0: i32) -> (i32, i32) {
    %c0_i32 = arith.constant 0 : i32
    %c0_i32_0 = arith.constant 0 : i32
    %c0_i32_1 = arith.constant 0 : i32
    return %c0_i32, %c0_i32_0 : i32, i32
  }
  func.func @transform_7(%arg0: i32) -> (i32, i32) {
    %c0_i32 = arith.constant 0 : i32
    %c0_i32_0 = arith.constant 0 : i32
    %c0_i32_1 = arith.constant 0 : i32
    return %c0_i32, %c0_i32_0 : i32, i32
  }
  func.func @transform_8(%arg0: i32) -> (i32, i32) {
    %c0_i32 = arith.constant 0 : i32
    %c0_i32_0 = arith.constant 0 : i32
    %c0_i32_1 = arith.constant 0 : i32
    return %c0_i32, %c0_i32_0 : i32, i32
  }
  func.func @transform_9(%arg0: i32) -> (i32, i32) {
    %c0_i32 = arith.constant 0 : i32
    %c0_i32_0 = arith.constant 0 : i32
    %c0_i32_1 = arith.constant 0 : i32
    return %c0_i32, %c0_i32_0 : i32, i32
  }
  func.func @transform_10(%arg0: i32) -> (i32, i32) {
    %c0_i32 = arith.constant 0 : i32
    %c0_i32_0 = arith.constant 0 : i32
    %c0_i32_1 = arith.constant 0 : i32
    return %c0_i32, %c0_i32_0 : i32, i32
  }
  func.func @transform_11(%arg0: i32) -> (i32, i32) {
    %c0_i32 = arith.constant 0 : i32
    %c0_i32_0 = arith.constant 0 : i32
    %c0_i32_1 = arith.constant 0 : i32
    return %c0_i32, %c0_i32_0 : i32, i32
  }
  func.func @transform_12(%arg0: i32) -> (i32, i32) {
    %c0_i32 = arith.constant 0 : i32
    %c0_i32_0 = arith.constant 0 : i32
    %c0_i32_1 = arith.constant 0 : i32
    return %c0_i32, %c0_i32_0 : i32, i32
  }
  func.func @transform_13(%arg0: i32) -> (i32, i32) {
    %c0_i32 = arith.constant 0 : i32
    %c0_i32_0 = arith.constant 0 : i32
    %c0_i32_1 = arith.constant 0 : i32
    return %c0_i32, %c0_i32_0 : i32, i32
  }
  func.func @transform_14(%arg0: i32) -> (i32, i32) {
    %c0_i32 = arith.constant 0 : i32
    %c0_i32_0 = arith.constant 0 : i32
    return %arg0, %c0_i32 : i32, i32
  }
  func.func @transform_15(%arg0: i32) -> (i32, i32) {
    %c0_i32 = arith.constant 0 : i32
    %c0_i32_0 = arith.constant 0 : i32
    return %arg0, %c0_i32 : i32, i32
  }
}

</mosaic_0001>

<llo_original>
// kernel: vae_forward.1
$region0: #{vae_forward.1}
  #allocation0 [shape = 'u32[]', space=smem, size = 0x4, offset = 0x4, fixed_abs, tag = 'smem constant byte address 0x4 - core index']
  #allocation1 [shape = 'u32[72,128]{1,0:T(1,128)}', space=vmem, size = 0x9000, scoped, tag = 'internal scratch']
  %s0 = inlined_call_operand.vmem [shape: bf16[32,128], index: 0, kind: input, shape index: {}]
  %s1 = inlined_call_operand.vmem [shape: bf16[32,64], index: 1, kind: input, shape index: {}]
  %s2 = inlined_call_operand.vmem [shape: bf16[128,128], index: 2, kind: input, shape index: {}]
  %s3 = inlined_call_operand.vmem [shape: f32[1,128], index: 3, kind: input, shape index: {}]
  %s4 = inlined_call_operand.vmem [shape: bf16[128,128], index: 4, kind: input, shape index: {}]
  %s5 = inlined_call_operand.vmem [shape: f32[1,128], index: 5, kind: input, shape index: {}]
  %s6 = inlined_call_operand.hbm [shape: bf16[128,128], index: 6, kind: input, shape index: {}]
  %s7 = inlined_call_operand.vmem [shape: f32[1,128], index: 7, kind: input, shape index: {}]
  %s8 = inlined_call_operand.hbm [shape: bf16[64,128], index: 8, kind: input, shape index: {}]
  %s9 = inlined_call_operand.hbm [shape: f32[1,128], index: 9, kind: input, shape index: {}]
  %s10 = inlined_call_operand.hbm [shape: bf16[128,128], index: 10, kind: input, shape index: {}]
  %s11 = inlined_call_operand.hbm [shape: f32[1,128], index: 11, kind: input, shape index: {}]
  %s12 = inlined_call_operand.hbm [shape: bf16[128,128], index: 12, kind: input, shape index: {}]
  %s13 = inlined_call_operand.vmem [shape: f32[1,128], index: 13, kind: input, shape index: {}]
  %s14 = inlined_call_operand.vmem [shape: bf16[32,128], index: 14, kind: output, shape index: {0}]
  %s15 = inlined_call_operand.vmem [shape: f32[32,128], index: 15, kind: output, shape index: {1}]
  %16 = xla_tuple %s14, %s15
  %s17 = sld [smem:[#allocation0]]
  $region121: #{vae_forward.1} parent=0
    _
  %s19 = ssub.s32 1, %s17
  %s20 = scalar_select 0, %s19, %s17
  $region1: #{vae_forward.1} parent=0
    #allocation2 [shape = 'u8[32768]{0}', space=vmem, size = 0x8000, scoped, tag = 'input window, operand 6, single buffered']
    #allocation3 [shape = 's32[2]{0}', space=sflag, size = 0x8, scoped, tag = 'scoped memory for vae_forward.1']
    #allocation4 [shape = 'u8[16384]{0}', space=vmem, size = 0x4000, scoped, tag = 'input window, operand 8, single buffered']
    #allocation5 [shape = 's32[1]{0}', space=sflag, size = 0x4, scoped, tag = 'scoped memory for vae_forward.1']
    #allocation6 [shape = 'u8[512]{0}', space=vmem, size = 0x400, scoped, tag = 'input window, operand 9, single buffered']
    #allocation7 [shape = 'u8[32768]{0}', space=vmem, size = 0x8000, scoped, tag = 'input window, operand 10, single buffered']
    #allocation8 [shape = 's32[1]{0}', space=sflag, size = 0x4, scoped, tag = 'scoped memory for vae_forward.1']
    #allocation9 [shape = 'u8[512]{0}', space=vmem, size = 0x400, scoped, tag = 'input window, operand 11, single buffered']
    #allocation10 [shape = 'u8[32768]{0}', space=vmem, size = 0x8000, scoped, tag = 'input window, operand 12, single buffered']
    #allocation11 [shape = 's32[1]{0}', space=sflag, size = 0x4, scoped, tag = 'scoped memory for vae_forward.1']
    %21 = vsyncpa [#allocation3], 0
    %22 = vsyncpa [#allocation5], 0
    %23 = vsyncpa [#allocation8], 0
    %24 = vsyncpa [#allocation11], 0
    loop: start=0, step=1, limit=4
    $region2: #{vae_forward.1} parent=1 // loop_pre_header
      _
    $region3: #{vae_forward.1} parent=1 // loop_header
      %s26 = sphi 0, %s30
      %p27 = scmp.ge.s32.totalorder %s26, 4
      %s36 = sphi 0, %s38
      %s39 = sphi 0, %s36
      %s40 = sphi 0, %s39
      %s56 = sphi 0, %s40
      %s62 = sphi 0, %s64
      %s65 = sphi 0, %s62
      %s66 = sphi 0, %s65
      %s82 = sphi 0, %s66
      %s86 = sphi 0, %s86
      %s88 = sphi 0, %s86
      %s89 = sphi 0, %s88
      %s103 = sphi 0, %s89
      %s107 = sphi 0, %s107
      %s109 = sphi 0, %s107
      %s110 = sphi 0, %s109
      %s124 = sphi 0, %s110
      %s128 = sphi 0, %s128
      %s130 = sphi 0, %s128
      %s131 = sphi 0, %s130
      %s145 = sphi 0, %s131
      %s149 = sphi 0, %s149
      %s151 = sphi 0, %s149
      %s152 = sphi 0, %s151
      %s166 = sphi 0, %s152
      %s170 = sphi 0, %s170
      %s172 = sphi 0, %s170
      %s173 = sphi 0, %s172
      %s187 = sphi 0, %s173
      %s191 = sphi 0, %s191
      %s193 = sphi 0, %s191
      %s194 = sphi 0, %s193
      %s208 = sphi 0, %s194
      %s212 = sphi 0, %s212
      %s214 = sphi 0, %s212
      %s215 = sphi 0, %s214
      %s229 = sphi 0, %s215
      %s233 = sphi 0, %s233
      %s235 = sphi 0, %s233
      %s236 = sphi 0, %s235
      %s250 = sphi 0, %s236
      %s254 = sphi 0, %s254
      %s256 = sphi 0, %s254
      %s257 = sphi 0, %s256
      %s271 = sphi 0, %s257
      %s275 = sphi 0, %s275
      %s277 = sphi 0, %s275
      %s278 = sphi 0, %s277
      %s292 = sphi 0, %s278
      %s296 = sphi 0, %s296
      %s298 = sphi 0, %s296
      %s299 = sphi 0, %s298
      %s313 = sphi 0, %s299
      %s317 = sphi 0, %s317
      %s319 = sphi 0, %s317
      %s320 = sphi 0, %s319
      %s334 = sphi 0, %s320
      %s340 = sphi 0, %s342
      %s343 = sphi 0, %s340
      %s344 = sphi 0, %s343
      %s360 = sphi 0, %s344
      %s366 = sphi 0, %s368
      %s369 = sphi 0, %s366
      %s370 = sphi 0, %s369
      %s386 = sphi 0, %s370
    $region4: #{vae_forward.1} parent=1 // loop_header_branch
      %29 = sbr.rel (%p27) target = $region8
    $region5: #{vae_forward.1} parent=1 // loop_body
      %s31 = ssub.s32 %s26, 1
      %s32 = ssub.s32 %s26, 2
      %s33 = sadd.s32 %s26, 1
      %s34 = ssub.s32 %s26, %s33
      %p35 = scmp.eq.s32.totalorder %s34, 0
      %s37 = sadd.s32 %s36, 1
      %s38 = scalar_select %p35, %s36, %s37
      %p41 = pneg %p35
      %p42 = scmp.eq.s32.totalorder %s26, 1
      %p43 = por %p41, %p42
      %p44 = scmp.ne.s32.totalorder %s36, %s39
      %p45 = scmp.eq.s32.totalorder %s26, 0
      %p46 = por %p44, %p45
      %p47 = scmp.ne.s32.totalorder %s36, %s39
      %p48 = scmp.eq.s32.totalorder %s31, 1
      %p49 = por %p47, %p48
      %p50 = scmp.ne.s32.totalorder %s39, %s40
      %p51 = scmp.eq.s32.totalorder %s31, 0
      %p52 = por %p50, %p51
      %p53 = scmp.ne.s32.totalorder %s39, %s40
      %p54 = scmp.eq.s32.totalorder %s32, 1
      %p55 = por %p53, %p54
      %p57 = scmp.ne.s32.totalorder %s40, %s56
      %p58 = scmp.eq.s32.totalorder %s32, 0
      %p59 = por %p57, %p58
      %s60 = ssub.s32 %s26, %s33
      %p61 = scmp.eq.s32.totalorder %s60, 0
      %s63 = sadd.s32 %s62, 1
      %s64 = scalar_select %p61, %s62, %s63
      %p67 = pneg %p61
      %p68 = scmp.eq.s32.totalorder %s26, 1
      %p69 = por %p67, %p68
      %p70 = scmp.ne.s32.totalorder %s62, %s65
      %p71 = scmp.eq.s32.totalorder %s26, 0
      %p72 = por %p70, %p71
      %p73 = scmp.ne.s32.totalorder %s62, %s65
      %p74 = scmp.eq.s32.totalorder %s31, 1
      %p75 = por %p73, %p74
      %p76 = scmp.ne.s32.totalorder %s65, %s66
      %p77 = scmp.eq.s32.totalorder %s31, 0
      %p78 = por %p76, %p77
      %p79 = scmp.ne.s32.totalorder %s65, %s66
      %p80 = scmp.eq.s32.totalorder %s32, 1
      %p81 = por %p79, %p80
      %p83 = scmp.ne.s32.totalorder %s66, %s82
      %p84 = scmp.eq.s32.totalorder %s32, 0
      %p85 = por %p83, %p84
      %s87 = sadd.s32 %s86, 1
      %p90 = scmp.eq.s32.totalorder %s26, 1
      %p91 = scmp.ne.s32.totalorder %s86, %s88
      %p92 = scmp.eq.s32.totalorder %s26, 0
      %p93 = por %p91, %p92
      %p94 = scmp.ne.s32.totalorder %s86, %s88
      %p95 = scmp.eq.s32.totalorder %s31, 1
      %p96 = por %p94, %p95
      %p97 = scmp.ne.s32.totalorder %s88, %s89
      %p98 = scmp.eq.s32.totalorder %s31, 0
      %p99 = por %p97, %p98
      %p100 = scmp.ne.s32.totalorder %s88, %s89
      %p101 = scmp.eq.s32.totalorder %s32, 1
      %p102 = por %p100, %p101
      %p104 = scmp.ne.s32.totalorder %s89, %s103
      %p105 = scmp.eq.s32.totalorder %s32, 0
      %p106 = por %p104, %p105
      %s108 = sadd.s32 %s107, 1
      %p111 = scmp.eq.s32.totalorder %s26, 1
      %p112 = scmp.ne.s32.totalorder %s107, %s109
      %p113 = scmp.eq.s32.totalorder %s26, 0
      %p114 = por %p112, %p113
      %p115 = scmp.ne.s32.totalorder %s107, %s109
      %p116 = scmp.eq.s32.totalorder %s31, 1
      %p117 = por %p115, %p116
      %p118 = scmp.ne.s32.totalorder %s109, %s110
      %p119 = scmp.eq.s32.totalorder %s31, 0
      %p120 = por %p118, %p119
      %p121 = scmp.ne.s32.totalorder %s109, %s110
      %p122 = scmp.eq.s32.totalorder %s32, 1
      %p123 = por %p121, %p122
      %p125 = scmp.ne.s32.totalorder %s110, %s124
      %p126 = scmp.eq.s32.totalorder %s32, 0
      %p127 = por %p125, %p126
      %s129 = sadd.s32 %s128, 1
      %p132 = scmp.eq.s32.totalorder %s26, 1
      %p133 = scmp.ne.s32.totalorder %s128, %s130
      %p134 = scmp.eq.s32.totalorder %s26, 0
      %p135 = por %p133, %p134
      %p136 = scmp.ne.s32.totalorder %s128, %s130
      %p137 = scmp.eq.s32.totalorder %s31, 1
      %p138 = por %p136, %p137
      %p139 = scmp.ne.s32.totalorder %s130, %s131
      %p140 = scmp.eq.s32.totalorder %s31, 0
      %p141 = por %p139, %p140
      %p142 = scmp.ne.s32.totalorder %s130, %s131
      %p143 = scmp.eq.s32.totalorder %s32, 1
      %p144 = por %p142, %p143
      %p146 = scmp.ne.s32.totalorder %s131, %s145
      %p147 = scmp.eq.s32.totalorder %s32, 0
      %p148 = por %p146, %p147
      %s150 = sadd.s32 %s149, 1
      %p153 = scmp.eq.s32.totalorder %s26, 1
      %p154 = scmp.ne.s32.totalorder %s149, %s151
      %p155 = scmp.eq.s32.totalorder %s26, 0
      %p156 = por %p154, %p155
      %p157 = scmp.ne.s32.totalorder %s149, %s151
      %p158 = scmp.eq.s32.totalorder %s31, 1
      %p159 = por %p157, %p158
      %p160 = scmp.ne.s32.totalorder %s151, %s152
      %p161 = scmp.eq.s32.totalorder %s31, 0
      %p162 = por %p160, %p161
      %p163 = scmp.ne.s32.totalorder %s151, %s152
      %p164 = scmp.eq.s32.totalorder %s32, 1
      %p165 = por %p163, %p164
      %p167 = scmp.ne.s32.totalorder %s152, %s166
      %p168 = scmp.eq.s32.totalorder %s32, 0
      %p169 = por %p167, %p168
      %s171 = sadd.s32 %s170, 1
      %p174 = scmp.eq.s32.totalorder %s26, 1
      %p175 = scmp.ne.s32.totalorder %s170, %s172
      %p176 = scmp.eq.s32.totalorder %s26, 0
      %p177 = por %p175, %p176
      %p178 = scmp.ne.s32.totalorder %s170, %s172
      %p179 = scmp.eq.s32.totalorder %s31, 1
      %p180 = por %p178, %p179
      %p181 = scmp.ne.s32.totalorder %s172, %s173
      %p182 = scmp.eq.s32.totalorder %s31, 0
      %p183 = por %p181, %p182
      %p184 = scmp.ne.s32.totalorder %s172, %s173
      %p185 = scmp.eq.s32.totalorder %s32, 1
      %p186 = por %p184, %p185
      %p188 = scmp.ne.s32.totalorder %s173, %s187
      %p189 = scmp.eq.s32.totalorder %s32, 0
      %p190 = por %p188, %p189
      %s192 = sadd.s32 %s191, 1
      %p195 = scmp.eq.s32.totalorder %s26, 1
      %p196 = scmp.ne.s32.totalorder %s191, %s193
      %p197 = scmp.eq.s32.totalorder %s26, 0
      %p198 = por %p196, %p197
      %p199 = scmp.ne.s32.totalorder %s191, %s193
      %p200 = scmp.eq.s32.totalorder %s31, 1
      %p201 = por %p199, %p200
      %p202 = scmp.ne.s32.totalorder %s193, %s194
      %p203 = scmp.eq.s32.totalorder %s31, 0
      %p204 = por %p202, %p203
      %p205 = scmp.ne.s32.totalorder %s193, %s194
      %p206 = scmp.eq.s32.totalorder %s32, 1
      %p207 = por %p205, %p206
      %p209 = scmp.ne.s32.totalorder %s194, %s208
      %p210 = scmp.eq.s32.totalorder %s32, 0
      %p211 = por %p209, %p210
      %s213 = sadd.s32 %s212, 1
      %p216 = scmp.eq.s32.totalorder %s26, 1
      %p217 = scmp.ne.s32.totalorder %s212, %s214
      %p218 = scmp.eq.s32.totalorder %s26, 0
      %p219 = por %p217, %p218
      %p220 = scmp.ne.s32.totalorder %s212, %s214
      %p221 = scmp.eq.s32.totalorder %s31, 1
      %p222 = por %p220, %p221
      %p223 = scmp.ne.s32.totalorder %s214, %s215
      %p224 = scmp.eq.s32.totalorder %s31, 0
      %p225 = por %p223, %p224
      %p226 = scmp.ne.s32.totalorder %s214, %s215
      %p227 = scmp.eq.s32.totalorder %s32, 1
      %p228 = por %p226, %p227
      %p230 = scmp.ne.s32.totalorder %s215, %s229
      %p231 = scmp.eq.s32.totalorder %s32, 0
      %p232 = por %p230, %p231
      %s234 = sadd.s32 %s233, 1
      %p237 = scmp.eq.s32.totalorder %s26, 1
      %p238 = scmp.ne.s32.totalorder %s233, %s235
      %p239 = scmp.eq.s32.totalorder %s26, 0
      %p240 = por %p238, %p239
      %p241 = scmp.ne.s32.totalorder %s233, %s235
      %p242 = scmp.eq.s32.totalorder %s31, 1
      %p243 = por %p241, %p242
      %p244 = scmp.ne.s32.totalorder %s235, %s236
      %p245 = scmp.eq.s32.totalorder %s31, 0
      %p246 = por %p244, %p245
      %p247 = scmp.ne.s32.totalorder %s235, %s236
      %p248 = scmp.eq.s32.totalorder %s32, 1
      %p249 = por %p247, %p248
      %p251 = scmp.ne.s32.totalorder %s236, %s250
      %p252 = scmp.eq.s32.totalorder %s32, 0
      %p253 = por %p251, %p252
      %s255 = sadd.s32 %s254, 1
      %p258 = scmp.eq.s32.totalorder %s26, 1
      %p259 = scmp.ne.s32.totalorder %s254, %s256
      %p260 = scmp.eq.s32.totalorder %s26, 0
      %p261 = por %p259, %p260
      %p262 = scmp.ne.s32.totalorder %s254, %s256
      %p263 = scmp.eq.s32.totalorder %s31, 1
      %p264 = por %p262, %p263
      %p265 = scmp.ne.s32.totalorder %s256, %s257
      %p266 = scmp.eq.s32.totalorder %s31, 0
      %p267 = por %p265, %p266
      %p268 = scmp.ne.s32.totalorder %s256, %s257
      %p269 = scmp.eq.s32.totalorder %s32, 1
      %p270 = por %p268, %p269
      %p272 = scmp.ne.s32.totalorder %s257, %s271
      %p273 = scmp.eq.s32.totalorder %s32, 0
      %p274 = por %p272, %p273
      %s276 = sadd.s32 %s275, 1
      %p279 = scmp.eq.s32.totalorder %s26, 1
      %p280 = scmp.ne.s32.totalorder %s275, %s277
      %p281 = scmp.eq.s32.totalorder %s26, 0
      %p282 = por %p280, %p281
      %p283 = scmp.ne.s32.totalorder %s275, %s277
      %p284 = scmp.eq.s32.totalorder %s31, 1
      %p285 = por %p283, %p284
      %p286 = scmp.ne.s32.totalorder %s277, %s278
      %p287 = scmp.eq.s32.totalorder %s31, 0
      %p288 = por %p286, %p287
      %p289 = scmp.ne.s32.totalorder %s277, %s278
      %p290 = scmp.eq.s32.totalorder %s32, 1
      %p291 = por %p289, %p290
      %p293 = scmp.ne.s32.totalorder %s278, %s292
      %p294 = scmp.eq.s32.totalorder %s32, 0
      %p295 = por %p293, %p294
      %s297 = sadd.s32 %s296, 1
      %p300 = scmp.eq.s32.totalorder %s26, 1
      %p301 = scmp.ne.s32.totalorder %s296, %s298
      %p302 = scmp.eq.s32.totalorder %s26, 0
      %p303 = por %p301, %p302
      %p304 = scmp.ne.s32.totalorder %s296, %s298
      %p305 = scmp.eq.s32.totalorder %s31, 1
      %p306 = por %p304, %p305
      %p307 = scmp.ne.s32.totalorder %s298, %s299
      %p308 = scmp.eq.s32.totalorder %s31, 0
      %p309 = por %p307, %p308
      %p310 = scmp.ne.s32.totalorder %s298, %s299
      %p311 = scmp.eq.s32.totalorder %s32, 1
      %p312 = por %p310, %p311
      %p314 = scmp.ne.s32.totalorder %s299, %s313
      %p315 = scmp.eq.s32.totalorder %s32, 0
      %p316 = por %p314, %p315
      %s318 = sadd.s32 %s317, 1
      %p321 = scmp.eq.s32.totalorder %s26, 1
      %p322 = scmp.ne.s32.totalorder %s317, %s319
      %p323 = scmp.eq.s32.totalorder %s26, 0
      %p324 = por %p322, %p323
      %p325 = scmp.ne.s32.totalorder %s317, %s319
      %p326 = scmp.eq.s32.totalorder %s31, 1
      %p327 = por %p325, %p326
      %p328 = scmp.ne.s32.totalorder %s319, %s320
      %p329 = scmp.eq.s32.totalorder %s31, 0
      %p330 = por %p328, %p329
      %p331 = scmp.ne.s32.totalorder %s319, %s320
      %p332 = scmp.eq.s32.totalorder %s32, 1
      %p333 = por %p331, %p332
      %p335 = scmp.ne.s32.totalorder %s320, %s334
      %p336 = scmp.eq.s32.totalorder %s32, 0
      %p337 = por %p335, %p336
      %s338 = ssub.s32 %s26, %s33
      %p339 = scmp.eq.s32.totalorder %s338, 0
      %s341 = sadd.s32 %s340, 1
      %s342 = scalar_select %p339, %s340, %s341
      %p345 = pneg %p339
      %p346 = scmp.eq.s32.totalorder %s26, 1
      %p347 = por %p345, %p346
      %p348 = scmp.ne.s32.totalorder %s340, %s343
      %p349 = scmp.eq.s32.totalorder %s26, 0
      %p350 = por %p348, %p349
      %p351 = scmp.ne.s32.totalorder %s340, %s343
      %p352 = scmp.eq.s32.totalorder %s31, 1
      %p353 = por %p351, %p352
      %p354 = scmp.ne.s32.totalorder %s343, %s344
      %p355 = scmp.eq.s32.totalorder %s31, 0
      %p356 = por %p354, %p355
      %p357 = scmp.ne.s32.totalorder %s343, %s344
      %p358 = scmp.eq.s32.totalorder %s32, 1
      %p359 = por %p357, %p358
      %p361 = scmp.ne.s32.totalorder %s344, %s360
      %p362 = scmp.eq.s32.totalorder %s32, 0
      %p363 = por %p361, %p362
      %s364 = ssub.s32 %s26, %s33
      %p365 = scmp.eq.s32.totalorder %s364, 0
      %s367 = sadd.s32 %s366, 1
      %s368 = scalar_select %p365, %s366, %s367
      %p371 = pneg %p365
      %p372 = scmp.eq.s32.totalorder %s26, 1
      %p373 = por %p371, %p372
      %p374 = scmp.ne.s32.totalorder %s366, %s369
      %p375 = scmp.eq.s32.totalorder %s26, 0
      %p376 = por %p374, %p375
      %p377 = scmp.ne.s32.totalorder %s366, %s369
      %p378 = scmp.eq.s32.totalorder %s31, 1
      %p379 = por %p377, %p378
      %p380 = scmp.ne.s32.totalorder %s369, %s370
      %p381 = scmp.eq.s32.totalorder %s31, 0
      %p382 = por %p380, %p381
      %p383 = scmp.ne.s32.totalorder %s369, %s370
      %p384 = scmp.eq.s32.totalorder %s32, 1
      %p385 = por %p383, %p384
      %p387 = scmp.ne.s32.totalorder %s370, %s386
      %p388 = scmp.eq.s32.totalorder %s32, 0
      %p389 = por %p387, %p388
      %p390 = scmp.le.s32.totalorder 1, %s26
      %p391 = scmp.lt.s32.totalorder %s26, 3
      %p392 = pnand %p390, %p391
      %p393 = pneg %p392
      // Predicated region
      $region9: #{vae_forward.1} parent=5 // pred_check
        _
      $region10: #{vae_forward.1} parent=5 // pred_check_branch
        %395 = sbr.rel (%p392) target = $region12
      $region11: #{vae_forward.1} parent=5 // pred_region
        %s396 = ssub.s32 %s26, 1
        // Predicated region
        $region13: #{vae_forward.1} parent=11 // pred_check
          %p397 = pneg %p99
        $region14: #{vae_forward.1} parent=11 // pred_check_branch
          %399 = sbr.rel (%p397) target = $region16
        $region15: #{vae_forward.1} parent=11 // pred_region
          _
        $region16: #{vae_forward.1} parent=11 // pred_fallthru
          _
        // Predicated region
        $region17: #{vae_forward.1} parent=11 // pred_check
          %p400 = pneg %p120
        $region18: #{vae_forward.1} parent=11 // pred_check_branch
          %402 = sbr.rel (%p400) target = $region20
        $region19: #{vae_forward.1} parent=11 // pred_region
          _
        $region20: #{vae_forward.1} parent=11 // pred_fallthru
          _
        // Predicated region
        $region21: #{vae_forward.1} parent=11 // pred_check
          %p403 = pneg %p141
        $region22: #{vae_forward.1} parent=11 // pred_check_branch
          %405 = sbr.rel (%p403) target = $region24
        $region23: #{vae_forward.1} parent=11 // pred_region
          _
        $region24: #{vae_forward.1} parent=11 // pred_fallthru
          _
        // Predicated region
        $region25: #{vae_forward.1} parent=11 // pred_check
          %p406 = pneg %p162
        $region26: #{vae_forward.1} parent=11 // pred_check_branch
          %408 = sbr.rel (%p406) target = $region28
        $region27: #{vae_forward.1} parent=11 // pred_region
          _
        $region28: #{vae_forward.1} parent=11 // pred_fallthru
          _
        // Predicated region
        $region29: #{vae_forward.1} parent=11 // pred_check
          %p409 = pneg %p183
        $region30: #{vae_forward.1} parent=11 // pred_check_branch
          %411 = sbr.rel (%p409) target = $region32
        $region31: #{vae_forward.1} parent=11 // pred_region
          %413 = vsyncadd [#allocation3], 0
          %s414 = sshll.u32 %s6, 4
          %s415 = int_to_ptr.hbm [resolvable:$true] %s414
          %s416 = sshll.u32 [#allocation2], 4
          %s417 = int_to_ptr.vmem [resolvable:$true] %s416
          %422 = dma.hbm_to_vmem [thread:$0]  %s415, 1024, %s417, [#allocation3], 64, 64, 4
        $region32: #{vae_forward.1} parent=11 // pred_fallthru
          _
        // Predicated region
        $region33: #{vae_forward.1} parent=11 // pred_check
          %p423 = pneg %p204
        $region34: #{vae_forward.1} parent=11 // pred_check_branch
          %425 = sbr.rel (%p423) target = $region36
        $region35: #{vae_forward.1} parent=11 // pred_region
          _
        $region36: #{vae_forward.1} parent=11 // pred_fallthru
          _
        // Predicated region
        $region37: #{vae_forward.1} parent=11 // pred_check
          %p426 = pneg %p225
        $region38: #{vae_forward.1} parent=11 // pred_check_branch
          %428 = sbr.rel (%p426) target = $region40
        $region39: #{vae_forward.1} parent=11 // pred_region
          %430 = vsyncadd [#allocation5], 0
          %s431 = sshll.u32 %s8, 4
          %s432 = int_to_ptr.hbm [resolvable:$true] %s431
          %s433 = sshll.u32 [#allocation4], 4
          %s434 = int_to_ptr.vmem [resolvable:$true] %s433
          %439 = dma.hbm_to_vmem [thread:$0]  %s432, 512, %s434, [#allocation5], 64, 64, 4
        $region40: #{vae_forward.1} parent=11 // pred_fallthru
          _
        // Predicated region
        $region41: #{vae_forward.1} parent=11 // pred_check
          %p440 = pneg %p246
        $region42: #{vae_forward.1} parent=11 // pred_check_branch
          %442 = sbr.rel (%p440) target = $region44
        $region43: #{vae_forward.1} parent=11 // pred_region
          %444 = vsyncadd [#allocation5], 0
          %s446 = sshll.u32 %s9, 4
          %s447 = int_to_ptr.hbm [resolvable:$true] %s446
          %s448 = sshll.u32 [#allocation6], 4
          %s449 = int_to_ptr.vmem [resolvable:$true] %s448
          %451 = dma.hbm_to_vmem [thread:$0]  %s447, 16, %s449, [#allocation5]
        $region44: #{vae_forward.1} parent=11 // pred_fallthru
          _
        // Predicated region
        $region45: #{vae_forward.1} parent=11 // pred_check
          %p452 = pneg %p267
        $region46: #{vae_forward.1} parent=11 // pred_check_branch
          %454 = sbr.rel (%p452) target = $region48
        $region47: #{vae_forward.1} parent=11 // pred_region
          %456 = vsyncadd [#allocation8], 0
          %s457 = sshll.u32 %s10, 4
          %s458 = int_to_ptr.hbm [resolvable:$true] %s457
          %s459 = sshll.u32 [#allocation7], 4
          %s460 = int_to_ptr.vmem [resolvable:$true] %s459
          %465 = dma.hbm_to_vmem [thread:$0]  %s458, 1024, %s460, [#allocation8], 64, 64, 4
        $region48: #{vae_forward.1} parent=11 // pred_fallthru
          _
        // Predicated region
        $region49: #{vae_forward.1} parent=11 // pred_check
          %p466 = pneg %p288
        $region50: #{vae_forward.1} parent=11 // pred_check_branch
          %468 = sbr.rel (%p466) target = $region52
        $region51: #{vae_forward.1} parent=11 // pred_region
          %470 = vsyncadd [#allocation8], 0
          %s472 = sshll.u32 %s11, 4
          %s473 = int_to_ptr.hbm [resolvable:$true] %s472
          %s474 = sshll.u32 [#allocation9], 4
          %s475 = int_to_ptr.vmem [resolvable:$true] %s474
          %477 = dma.hbm_to_vmem [thread:$0]  %s473, 16, %s475, [#allocation8]
        $region52: #{vae_forward.1} parent=11 // pred_fallthru
          _
        // Predicated region
        $region53: #{vae_forward.1} parent=11 // pred_check
          %p478 = pneg %p309
        $region54: #{vae_forward.1} parent=11 // pred_check_branch
          %480 = sbr.rel (%p478) target = $region56
        $region55: #{vae_forward.1} parent=11 // pred_region
          %482 = vsyncadd [#allocation11], 0
          %s483 = sshll.u32 %s12, 4
          %s484 = int_to_ptr.hbm [resolvable:$true] %s483
          %s485 = sshll.u32 [#allocation10], 4
          %s486 = int_to_ptr.vmem [resolvable:$true] %s485
          %491 = dma.hbm_to_vmem [thread:$0]  %s484, 1024, %s486, [#allocation11], 64, 64, 4
        $region56: #{vae_forward.1} parent=11 // pred_fallthru
          _
        // Predicated region
        $region57: #{vae_forward.1} parent=11 // pred_check
          %p492 = pneg %p330
        $region58: #{vae_forward.1} parent=11 // pred_check_branch
          %494 = sbr.rel (%p492) target = $region60
        $region59: #{vae_forward.1} parent=11 // pred_region
          _
        $region60: #{vae_forward.1} parent=11 // pred_fallthru
          _
      $region12: #{vae_forward.1} parent=5 // pred_fallthru
        _
      %p495 = scmp.lt.s32.totalorder %s26, 2
      // Predicated region
      $region61: #{vae_forward.1} parent=5 // pred_check
        %p496 = pneg %p495
      $region62: #{vae_forward.1} parent=5 // pred_check_branch
        %498 = sbr.rel (%p496) target = $region64
      $region63: #{vae_forward.1} parent=5 // pred_region
        // Predicated region
        $region65: #{vae_forward.1} parent=63 // pred_check
          %p499 = pneg %p46
        $region66: #{vae_forward.1} parent=63 // pred_check_branch
          %501 = sbr.rel (%p499) target = $region68
        $region67: #{vae_forward.1} parent=63 // pred_region
          %s502 = smul.u32 2, %s26
          %p503 = scmp.lt.s32.totalorder %s502, 3
          %s504 = scalar_select %p503, %s502, 3
          %s505 = smul.addr %s504, 4
          %s506 = scalar_lea.vmem %s0, %s505
          %s507 = smul.u32 2, %s26
        $region68: #{vae_forward.1} parent=63 // pred_fallthru
          _
        // Predicated region
        $region69: #{vae_forward.1} parent=63 // pred_check
          %p508 = pneg %p72
        $region70: #{vae_forward.1} parent=63 // pred_check_branch
          %510 = sbr.rel (%p508) target = $region72
        $region71: #{vae_forward.1} parent=63 // pred_region
          %s511 = smul.u32 2, %s26
          %p512 = scmp.lt.s32.totalorder %s511, 3
          %s513 = scalar_select %p512, %s511, 3
          %s514 = smul.addr %s513, 4
          %s515 = scalar_lea.vmem %s1, %s514
          %s516 = smul.u32 2, %s26
        $region72: #{vae_forward.1} parent=63 // pred_fallthru
          _
      $region64: #{vae_forward.1} parent=5 // pred_fallthru
        _
      %p517 = scmp.le.s32.totalorder 1, %s26
      %p518 = scmp.lt.s32.totalorder %s26, 3
      %p519 = pnand %p517, %p518
      %p520 = pneg %p519
      // Predicated region
      $region73: #{vae_forward.1} parent=5 // pred_check
        _
      $region74: #{vae_forward.1} parent=5 // pred_check_branch
        %522 = sbr.rel (%p519) target = $region76
      $region75: #{vae_forward.1} parent=5 // pred_region
        %s523 = ssub.s32 %s26, 1
        // Predicated region
        $region77: #{vae_forward.1} parent=75 // pred_check
          %p524 = pneg %p183
        $region78: #{vae_forward.1} parent=75 // pred_check_branch
          %526 = sbr.rel (%p524) target = $region80
        $region79: #{vae_forward.1} parent=75 // pred_region
          %528 = dma.done [#allocation3], 1024
        $region80: #{vae_forward.1} parent=75 // pred_fallthru
          _
        // Predicated region
        $region81: #{vae_forward.1} parent=75 // pred_check
          %p529 = pneg %p225
        $region82: #{vae_forward.1} parent=75 // pred_check_branch
          %531 = sbr.rel (%p529) target = $region84
        $region83: #{vae_forward.1} parent=75 // pred_region
          %533 = dma.done [#allocation5], 512
        $region84: #{vae_forward.1} parent=75 // pred_fallthru
          _
        // Predicated region
        $region85: #{vae_forward.1} parent=75 // pred_check
          %p534 = pneg %p246
        $region86: #{vae_forward.1} parent=75 // pred_check_branch
          %536 = sbr.rel (%p534) target = $region88
        $region87: #{vae_forward.1} parent=75 // pred_region
          %538 = dma.done [#allocation5], 16
        $region88: #{vae_forward.1} parent=75 // pred_fallthru
          _
        // Predicated region
        $region89: #{vae_forward.1} parent=75 // pred_check
          %p539 = pneg %p267
        $region90: #{vae_forward.1} parent=75 // pred_check_branch
          %541 = sbr.rel (%p539) target = $region92
        $region91: #{vae_forward.1} parent=75 // pred_region
          %543 = dma.done [#allocation8], 1024
        $region92: #{vae_forward.1} parent=75 // pred_fallthru
          _
        // Predicated region
        $region93: #{vae_forward.1} parent=75 // pred_check
          %p544 = pneg %p288
        $region94: #{vae_forward.1} parent=75 // pred_check_branch
          %546 = sbr.rel (%p544) target = $region96
        $region95: #{vae_forward.1} parent=75 // pred_region
          %548 = dma.done [#allocation8], 16
        $region96: #{vae_forward.1} parent=75 // pred_fallthru
          _
        // Predicated region
        $region97: #{vae_forward.1} parent=75 // pred_check
          %p549 = pneg %p309
        $region98: #{vae_forward.1} parent=75 // pred_check_branch
          %551 = sbr.rel (%p549) target = $region100
        $region99: #{vae_forward.1} parent=75 // pred_region
          %553 = dma.done [#allocation11], 1024
        $region100: #{vae_forward.1} parent=75 // pred_fallthru
          _
        %s554 = smul.u32 2, %s31
        %p555 = scmp.lt.s32.totalorder %s554, 3
        %s556 = scalar_select %p555, %s554, 3
        %s557 = smul.addr %s556, 4
        %s558 = scalar_lea.vmem %s0, %s557
        %p559 = pneg %p52
        %p560 = pneg %p49
        %s561 = smul.u32 2, %s31
        %p562 = scmp.lt.s32.totalorder %s561, 3
        %s563 = scalar_select %p562, %s561, 3
        %s564 = smul.addr %s563, 4
        %s565 = scalar_lea.vmem %s1, %s564
        %p566 = pneg %p78
        %p567 = pneg %p75
        %p568 = pneg %p99
        %p569 = pneg %p96
        %p570 = pneg %p120
        %p571 = pneg %p117
        %p572 = pneg %p141
        %p573 = pneg %p138
        %p574 = pneg %p162
        %p575 = pneg %p159
        %p576 = pneg %p183
        %p577 = pneg %p180
        %p578 = pneg %p204
        %p579 = pneg %p201
        %p580 = pneg %p225
        %p581 = pneg %p222
        %p582 = pneg %p246
        %p583 = pneg %p243
        %p584 = pneg %p267
        %p585 = pneg %p264
        %p586 = pneg %p288
        %p587 = pneg %p285
        %p588 = pneg %p309
        %p589 = pneg %p306
        %p590 = pneg %p330
        %p591 = pneg %p327
        %p592 = pneg %p356
        %p593 = pneg %p353
        %s594 = smul.u32 2, %s31
        %p595 = scmp.lt.s32.totalorder %s594, 3
        %s596 = scalar_select %p595, %s594, 3
        %s597 = smul.addr %s596, 4
        %s598 = scalar_lea.vmem %s14, %s597
        %p599 = pneg %p382
        %p600 = pneg %p379
        %s601 = smul.u32 2, %s31
        %p602 = scmp.lt.s32.totalorder %s601, 3
        %s603 = scalar_select %p602, %s601, 3
        %s604 = smul.addr %s603, 8
        %s605 = scalar_lea.vmem %s15, %s604
        %s606 = smul.u32 2, %s31
        %p607 = scmp.lt.s32.totalorder %s606, 3
        %s608 = scalar_select %p607, %s606, 3
        %s609 = smul.addr %s608, 4
        %s610 = scalar_lea.vmem %s0, %s609
        %s611 = smul.u32 2, %s31
        %s612 = smul.u32 2, %s31
        %p613 = scmp.lt.s32.totalorder %s612, 3
        %s614 = scalar_select %p613, %s612, 3
        %s615 = smul.addr %s614, 4
        %s616 = scalar_lea.vmem %s1, %s615
        %s617 = smul.u32 2, %s31
        %s618 = smul.u32 2, %s31
        %p619 = scmp.lt.s32.totalorder %s618, 3
        %s620 = scalar_select %p619, %s618, 3
        %s621 = smul.addr %s620, 4
        %s622 = scalar_lea.vmem %s14, %s621
        %s623 = smul.u32 2, %s31
        %s624 = smul.u32 2, %s31
        %p625 = scmp.lt.s32.totalorder %s624, 3
        %s626 = scalar_select %p625, %s624, 3
        %s627 = smul.addr %s626, 8
        %s628 = scalar_lea.vmem %s15, %s627
        %s629 = smul.u32 2, %s31
        %v631 = vld [vmem:[%s610] sm:$0xf]
        %v632 = vld [vmem:[%s610 + $0x4] sm:$0xf]
        %v633 = vld [vmem:[%s2] sm:$0xf]
        %v634 = vld [vmem:[%s2 + $0x4] sm:$0xf]
        %v635 = vld [vmem:[%s2 + $0x8] sm:$0xf]
        %v636 = vld [vmem:[%s2 + $0xc] sm:$0xf]
        %v637 = vld [vmem:[%s2 + $0x10] sm:$0xf]
        %v638 = vld [vmem:[%s2 + $0x14] sm:$0xf]
        %v639 = vld [vmem:[%s2 + $0x18] sm:$0xf]
        %v640 = vld [vmem:[%s2 + $0x1c] sm:$0xf]
        %v641 = vld [vmem:[%s2 + $0x20] sm:$0xf]
        %v642 = vld [vmem:[%s2 + $0x24] sm:$0xf]
        %v643 = vld [vmem:[%s2 + $0x28] sm:$0xf]
        %v644 = vld [vmem:[%s2 + $0x2c] sm:$0xf]
        %v645 = vld [vmem:[%s2 + $0x30] sm:$0xf]
        %v646 = vld [vmem:[%s2 + $0x34] sm:$0xf]
        %v647 = vld [vmem:[%s2 + $0x38] sm:$0xf]
        %v648 = vld [vmem:[%s2 + $0x3c] sm:$0xf]
        %v649 = vld [vmem:[%s3] sm:$0x1]
        %v651 = vperm.slane %v649, 0
        %v655 = vunpack.c.l.b16 %v631
        %v656 = vunpack.c.l.b16 %v632
        %v657 = vpack.c.b16 %v656, %v655
        %v675 = vunpack.c.l.b16 %v633
        %v676 = vunpack.c.l.b16 %v634
        %v677 = vunpack.c.l.b16 %v635
        %v678 = vunpack.c.l.b16 %v636
        %v679 = vunpack.c.l.b16 %v637
        %v680 = vunpack.c.l.b16 %v638
        %v681 = vunpack.c.l.b16 %v639
        %v682 = vunpack.c.l.b16 %v640
        %v683 = vunpack.c.l.b16 %v641
        %v684 = vunpack.c.l.b16 %v642
        %v685 = vunpack.c.l.b16 %v643
        %v686 = vunpack.c.l.b16 %v644
        %v687 = vunpack.c.l.b16 %v645
        %v688 = vunpack.c.l.b16 %v646
        %v689 = vunpack.c.l.b16 %v647
        %v690 = vunpack.c.l.b16 %v648
        %v691 = vpack.c.b16 %v676, %v675
        %v692 = vpack.c.b16 %v678, %v677
        %v693 = vpack.c.b16 %v680, %v679
        %v694 = vpack.c.b16 %v682, %v681
        %v695 = vpack.c.b16 %v684, %v683
        %v696 = vpack.c.b16 %v686, %v685
        %v697 = vpack.c.b16 %v688, %v687
        %v698 = vpack.c.b16 %v690, %v689
        %707 = vmatpush.bf16.msra.mxu0 %v698
        %708 = vmatpush.bf16.msra.mxu0 %v697
        %709 = vmatpush.bf16.msra.mxu0 %v696
        %710 = vmatpush.bf16.msra.mxu0 %v695
        %711 = vmatpush.bf16.msra.mxu0 %v694
        %712 = vmatpush.bf16.msra.mxu0 %v693
        %713 = vmatpush.bf16.msra.mxu0 %v692
        %714 = vmatpush.bf16.msra.mxu0 %v691
        %715 = vmatmul.bf16.gmra.mxu0 %v657
        %v716 = vpop.f32.mrf.mxu0
        %v717 = vadd.f32 %v651, %v716
        %v718 = vpop.f32.mrf.mxu0
        %v719 = vadd.f32 %v651, %v718
        %720 = vdwg.mxu0
        %v721 = vmul.f32 %v717, 0.5
        %v722 = vmul.f32 %v719, 0.5
        %v723 = vmul.f32 %v717, 0.70710677
        %v724 = vmul.f32 %v719, 0.70710677
        %v725 = vmul.f32 %v723, %v723
        %v726 = vmin.f32 16.0, %v725
        %v727 = vmul.f32 %v726, 2.1237322e-06
        %v728 = vadd.f32 %v727, 0.00028619796
        %v729 = vmul.f32 %v726, %v728
        %v730 = vadd.f32 %v729, 0.0036580483
        %v731 = vmul.f32 %v726, %v730
        %v732 = vadd.f32 %v731, 0.05243302
        %v733 = vmul.f32 %v726, %v732
        %v734 = vadd.f32 %v733, 0.18741608
        %v735 = vmul.f32 %v726, %v734
        %v736 = vadd.f32 %v735, 1.1283791
        %v737 = vmul.f32 %v723, %v736
        %v738 = vmul.f32 %v726, 3.8918573e-05
        %v739 = vadd.f32 %v738, 0.001143296
        %v740 = vmul.f32 %v726, %v739
        %v741 = vadd.f32 %v740, 0.014752088
        %v742 = vmul.f32 %v726, %v741
        %v743 = vadd.f32 %v742, 0.112945676
        %v744 = vmul.f32 %v726, %v743
        %v745 = vadd.f32 %v744, 0.4994258
        %v746 = vmul.f32 %v726, %v745
        %v747 = vadd.f32 %v746, 1.0
        %v748 = vrcp.pop %v747
        %v749 = vmul.f32 %v747, %v748
        %v750 = vsub.f32 1.0, %v749
        %v751 = vmul.f32 %v748, %v750
        %v752 = vadd.f32 %v748, %v751
        %vm753 = vweird.f32 %v747
        %vm754 = vweird.f32 %v748
        %vm755 = vmor %vm753, %vm754
        %v756 = vsel %vm755, %v748, %v752
        %v757 = vand.u32 2147483647, %v747
        %vm758 = vcmp.eq.f32.partialorder %v757, 8.507059e+37
        %v759 = vand.u32 %v747, 2147483648
        %v760 = vor.u32 1.1754944e-38, %v759
        %v761 = vsel %vm758, %v760, %v756
        %v762 = vmul.f32 %v737, %v761
        %v763 = vmin.f32 %v762, 1.0
        %v764 = vmax.f32 %v763, -1.0
        %v765 = vmul.f32 %v724, %v724
        %v766 = vmin.f32 16.0, %v765
        %v767 = vmul.f32 %v766, 2.1237322e-06
        %v768 = vadd.f32 %v767, 0.00028619796
        %v769 = vmul.f32 %v766, %v768
        %v770 = vadd.f32 %v769, 0.0036580483
        %v771 = vmul.f32 %v766, %v770
        %v772 = vadd.f32 %v771, 0.05243302
        %v773 = vmul.f32 %v766, %v772
        %v774 = vadd.f32 %v773, 0.18741608
        %v775 = vmul.f32 %v766, %v774
        %v776 = vadd.f32 %v775, 1.1283791
        %v777 = vmul.f32 %v724, %v776
        %v778 = vmul.f32 %v766, 3.8918573e-05
        %v779 = vadd.f32 %v778, 0.001143296
        %v780 = vmul.f32 %v766, %v779
        %v781 = vadd.f32 %v780, 0.014752088
        %v782 = vmul.f32 %v766, %v781
        %v783 = vadd.f32 %v782, 0.112945676
        %v784 = vmul.f32 %v766, %v783
        %v785 = vadd.f32 %v784, 0.4994258
        %v786 = vmul.f32 %v766, %v785
        %v787 = vadd.f32 %v786, 1.0
        %v788 = vrcp.pop %v787
        %v789 = vmul.f32 %v787, %v788
        %v790 = vsub.f32 1.0, %v789
        %v791 = vmul.f32 %v788, %v790
        %v792 = vadd.f32 %v788, %v791
        %vm793 = vweird.f32 %v787
        %vm794 = vweird.f32 %v788
        %vm795 = vmor %vm793, %vm794
        %v796 = vsel %vm795, %v788, %v792
        %v797 = vand.u32 2147483647, %v787
        %vm798 = vcmp.eq.f32.partialorder %v797, 8.507059e+37
        %v799 = vand.u32 %v787, 2147483648
        %v800 = vor.u32 1.1754944e-38, %v799
        %v801 = vsel %vm798, %v800, %v796
        %v802 = vmul.f32 %v777, %v801
        %v803 = vmin.f32 %v802, 1.0
        %v804 = vmax.f32 %v803, -1.0
        %v805 = vadd.f32 %v764, 1.0
        %v806 = vadd.f32 %v804, 1.0
        %v807 = vmul.f32 %v721, %v805
        %v808 = vmul.f32 %v722, %v806
        %v809 = vpack.c.bf16 %v808, %v807
        %v810 = vld [vmem:[%s4] sm:$0xf]
        %v811 = vld [vmem:[%s4 + $0x4] sm:$0xf]
        %v812 = vld [vmem:[%s4 + $0x8] sm:$0xf]
        %v813 = vld [vmem:[%s4 + $0xc] sm:$0xf]
        %v814 = vld [vmem:[%s4 + $0x10] sm:$0xf]
        %v815 = vld [vmem:[%s4 + $0x14] sm:$0xf]
        %v816 = vld [vmem:[%s4 + $0x18] sm:$0xf]
        %v817 = vld [vmem:[%s4 + $0x1c] sm:$0xf]
        %v818 = vld [vmem:[%s4 + $0x20] sm:$0xf]
        %v819 = vld [vmem:[%s4 + $0x24] sm:$0xf]
        %v820 = vld [vmem:[%s4 + $0x28] sm:$0xf]
        %v821 = vld [vmem:[%s4 + $0x2c] sm:$0xf]
        %v822 = vld [vmem:[%s4 + $0x30] sm:$0xf]
        %v823 = vld [vmem:[%s4 + $0x34] sm:$0xf]
        %v824 = vld [vmem:[%s4 + $0x38] sm:$0xf]
        %v825 = vld [vmem:[%s4 + $0x3c] sm:$0xf]
        %v826 = vld [vmem:[%s5] sm:$0x1]
        %v828 = vperm.slane %v826, 0
        %v846 = vunpack.c.l.b16 %v810
        %v847 = vunpack.c.l.b16 %v811
        %v848 = vunpack.c.l.b16 %v812
        %v849 = vunpack.c.l.b16 %v813
        %v850 = vunpack.c.l.b16 %v814
        %v851 = vunpack.c.l.b16 %v815
        %v852 = vunpack.c.l.b16 %v816
        %v853 = vunpack.c.l.b16 %v817
        %v854 = vunpack.c.l.b16 %v818
        %v855 = vunpack.c.l.b16 %v819
        %v856 = vunpack.c.l.b16 %v820
        %v857 = vunpack.c.l.b16 %v821
        %v858 = vunpack.c.l.b16 %v822
        %v859 = vunpack.c.l.b16 %v823
        %v860 = vunpack.c.l.b16 %v824
        %v861 = vunpack.c.l.b16 %v825
        %v862 = vpack.c.b16 %v847, %v846
        %v863 = vpack.c.b16 %v849, %v848
        %v864 = vpack.c.b16 %v851, %v850
        %v865 = vpack.c.b16 %v853, %v852
        %v866 = vpack.c.b16 %v855, %v854
        %v867 = vpack.c.b16 %v857, %v856
        %v868 = vpack.c.b16 %v859, %v858
        %v869 = vpack.c.b16 %v861, %v860
        %878 = vmatpush.bf16.msra.mxu0 %v869
        %879 = vmatpush.bf16.msra.mxu0 %v868
        %880 = vmatpush.bf16.msra.mxu0 %v867
        %881 = vmatpush.bf16.msra.mxu0 %v866
        %882 = vmatpush.bf16.msra.mxu0 %v865
        %883 = vmatpush.bf16.msra.mxu0 %v864
        %884 = vmatpush.bf16.msra.mxu0 %v863
        %885 = vmatpush.bf16.msra.mxu0 %v862
        %886 = vmatmul.bf16.gmra.mxu0 %v809
        %v887 = vpop.f32.mrf.mxu0
        %v888 = vadd.f32 %v828, %v887
        %v889 = vpop.f32.mrf.mxu0
        %v890 = vadd.f32 %v828, %v889
        %891 = vdwg.mxu0
        %v892 = vmul.f32 %v888, 0.5
        %v893 = vmul.f32 %v890, 0.5
        %v894 = vmul.f32 %v888, 0.70710677
        %v895 = vmul.f32 %v890, 0.70710677
        %v896 = vmul.f32 %v894, %v894
        %v897 = vmin.f32 16.0, %v896
        %v898 = vmul.f32 %v897, 2.1237322e-06
        %v899 = vadd.f32 %v898, 0.00028619796
        %v900 = vmul.f32 %v897, %v899
        %v901 = vadd.f32 %v900, 0.0036580483
        %v902 = vmul.f32 %v897, %v901
        %v903 = vadd.f32 %v902, 0.05243302
        %v904 = vmul.f32 %v897, %v903
        %v905 = vadd.f32 %v904, 0.18741608
        %v906 = vmul.f32 %v897, %v905
        %v907 = vadd.f32 %v906, 1.1283791
        %v908 = vmul.f32 %v894, %v907
        %v909 = vmul.f32 %v897, 3.8918573e-05
        %v910 = vadd.f32 %v909, 0.001143296
        %v911 = vmul.f32 %v897, %v910
        %v912 = vadd.f32 %v911, 0.014752088
        %v913 = vmul.f32 %v897, %v912
        %v914 = vadd.f32 %v913, 0.112945676
        %v915 = vmul.f32 %v897, %v914
        %v916 = vadd.f32 %v915, 0.4994258
        %v917 = vmul.f32 %v897, %v916
        %v918 = vadd.f32 %v917, 1.0
        %v919 = vrcp.pop %v918
        %v920 = vmul.f32 %v918, %v919
        %v921 = vsub.f32 1.0, %v920
        %v922 = vmul.f32 %v919, %v921
        %v923 = vadd.f32 %v919, %v922
        %vm924 = vweird.f32 %v918
        %vm925 = vweird.f32 %v919
        %vm926 = vmor %vm924, %vm925
        %v927 = vsel %vm926, %v919, %v923
        %v928 = vand.u32 2147483647, %v918
        %vm929 = vcmp.eq.f32.partialorder %v928, 8.507059e+37
        %v930 = vand.u32 %v918, 2147483648
        %v931 = vor.u32 1.1754944e-38, %v930
        %v932 = vsel %vm929, %v931, %v927
        %v933 = vmul.f32 %v908, %v932
        %v934 = vmin.f32 %v933, 1.0
        %v935 = vmax.f32 %v934, -1.0
        %v936 = vmul.f32 %v895, %v895
        %v937 = vmin.f32 16.0, %v936
        %v938 = vmul.f32 %v937, 2.1237322e-06
        %v939 = vadd.f32 %v938, 0.00028619796
        %v940 = vmul.f32 %v937, %v939
        %v941 = vadd.f32 %v940, 0.0036580483
        %v942 = vmul.f32 %v937, %v941
        %v943 = vadd.f32 %v942, 0.05243302
        %v944 = vmul.f32 %v937, %v943
        %v945 = vadd.f32 %v944, 0.18741608
        %v946 = vmul.f32 %v937, %v945
        %v947 = vadd.f32 %v946, 1.1283791
        %v948 = vmul.f32 %v895, %v947
        %v949 = vmul.f32 %v937, 3.8918573e-05
        %v950 = vadd.f32 %v949, 0.001143296
        %v951 = vmul.f32 %v937, %v950
        %v952 = vadd.f32 %v951, 0.014752088
        %v953 = vmul.f32 %v937, %v952
        %v954 = vadd.f32 %v953, 0.112945676
        %v955 = vmul.f32 %v937, %v954
        %v956 = vadd.f32 %v955, 0.4994258
        %v957 = vmul.f32 %v937, %v956
        %v958 = vadd.f32 %v957, 1.0
        %v959 = vrcp.pop %v958
        %v960 = vmul.f32 %v958, %v959
        %v961 = vsub.f32 1.0, %v960
        %v962 = vmul.f32 %v959, %v961
        %v963 = vadd.f32 %v959, %v962
        %vm964 = vweird.f32 %v958
        %vm965 = vweird.f32 %v959
        %vm966 = vmor %vm964, %vm965
        %v967 = vsel %vm966, %v959, %v963
        %v968 = vand.u32 2147483647, %v958
        %vm969 = vcmp.eq.f32.partialorder %v968, 8.507059e+37
        %v970 = vand.u32 %v958, 2147483648
        %v971 = vor.u32 1.1754944e-38, %v970
        %v972 = vsel %vm969, %v971, %v967
        %v973 = vmul.f32 %v948, %v972
        %v974 = vmin.f32 %v973, 1.0
        %v975 = vmax.f32 %v974, -1.0
        %v976 = vadd.f32 %v935, 1.0
        %v977 = vadd.f32 %v975, 1.0
        %v978 = vmul.f32 %v892, %v976
        %v979 = vmul.f32 %v893, %v977
        %v980 = vpack.c.bf16 %v979, %v978
        %v981 = vld [vmem:[#allocation2] sm:$0xf]
        %v982 = vld [vmem:[#allocation2 + $0x4] sm:$0xf]
        %v983 = vld [vmem:[#allocation2 + $0x8] sm:$0xf]
        %v984 = vld [vmem:[#allocation2 + $0xc] sm:$0xf]
        %v985 = vld [vmem:[#allocation2 + $0x10] sm:$0xf]
        %v986 = vld [vmem:[#allocation2 + $0x14] sm:$0xf]
        %v987 = vld [vmem:[#allocation2 + $0x18] sm:$0xf]
        %v988 = vld [vmem:[#allocation2 + $0x1c] sm:$0xf]
        %v989 = vld [vmem:[#allocation2 + $0x20] sm:$0xf]
        %v990 = vld [vmem:[#allocation2 + $0x24] sm:$0xf]
        %v991 = vld [vmem:[#allocation2 + $0x28] sm:$0xf]
        %v992 = vld [vmem:[#allocation2 + $0x2c] sm:$0xf]
        %v993 = vld [vmem:[#allocation2 + $0x30] sm:$0xf]
        %v994 = vld [vmem:[#allocation2 + $0x34] sm:$0xf]
        %v995 = vld [vmem:[#allocation2 + $0x38] sm:$0xf]
        %v996 = vld [vmem:[#allocation2 + $0x3c] sm:$0xf]
        %v997 = vld [vmem:[%s7] sm:$0x1]
        %v999 = vperm.slane %v997, 0
        %v1017 = vunpack.c.l.b16 %v981
        %v1018 = vunpack.c.l.b16 %v982
        %v1019 = vunpack.c.l.b16 %v983
        %v1020 = vunpack.c.l.b16 %v984
        %v1021 = vunpack.c.l.b16 %v985
        %v1022 = vunpack.c.l.b16 %v986
        %v1023 = vunpack.c.l.b16 %v987
        %v1024 = vunpack.c.l.b16 %v988
        %v1025 = vunpack.c.l.b16 %v989
        %v1026 = vunpack.c.l.b16 %v990
        %v1027 = vunpack.c.l.b16 %v991
        %v1028 = vunpack.c.l.b16 %v992
        %v1029 = vunpack.c.l.b16 %v993
        %v1030 = vunpack.c.l.b16 %v994
        %v1031 = vunpack.c.l.b16 %v995
        %v1032 = vunpack.c.l.b16 %v996
        %v1033 = vpack.c.b16 %v1018, %v1017
        %v1034 = vpack.c.b16 %v1020, %v1019
        %v1035 = vpack.c.b16 %v1022, %v1021
        %v1036 = vpack.c.b16 %v1024, %v1023
        %v1037 = vpack.c.b16 %v1026, %v1025
        %v1038 = vpack.c.b16 %v1028, %v1027
        %v1039 = vpack.c.b16 %v1030, %v1029
        %v1040 = vpack.c.b16 %v1032, %v1031
        %1049 = vmatpush.bf16.msra.mxu0 %v1040
        %1050 = vmatpush.bf16.msra.mxu0 %v1039
        %1051 = vmatpush.bf16.msra.mxu0 %v1038
        %1052 = vmatpush.bf16.msra.mxu0 %v1037
        %1053 = vmatpush.bf16.msra.mxu0 %v1036
        %1054 = vmatpush.bf16.msra.mxu0 %v1035
        %1055 = vmatpush.bf16.msra.mxu0 %v1034
        %1056 = vmatpush.bf16.msra.mxu0 %v1033
        %1057 = vmatmul.bf16.gmra.mxu0 %v980
        %v1058 = vpop.f32.mrf.mxu0
        %v1059 = vadd.f32 %v999, %v1058
        %v1060 = vpop.f32.mrf.mxu0
        %v1061 = vadd.f32 %v999, %v1060
        %1062 = vdwg.mxu0
        %1063 = vst [vmem:[%s628] sm:$0xff] %v1059
        %1064 = vst [vmem:[%s628 + $0x8] sm:$0xff] %v1061
        %v1065 = vmul.f32 %v1059, 0.5
        %v1066 = vmul.f32 %v1061, 0.5
        %v1067 = vmul.f32 %v1065, 1.442695
        %v1068 = vpow.pop %v1067
        %v1069 = vmul.f32 %v1066, 1.442695
        %v1070 = vpow.pop %v1069
        %v1071 = vld [vmem:[%s616] sm:$0xf]
        %v1072 = vld [vmem:[%s616 + $0x4] sm:$0xf]
        %v1073 = vunpack.c.l.bf16 %v1071
        %v1074 = vunpack.c.l.bf16 %v1072
        %1077 = vrot.lane.b32.xlu0 %v1068, 64
        %v1078 = vpop.permute.xlu0 %1077
        %1079 = vrot.lane.b32.xlu0 %v1070, 64
        %v1080 = vpop.permute.xlu0 %1079
        %v1083 = vmul.f32 %v1073, %v1078
        %v1084 = vmul.f32 %v1074, %v1080
        %v1085 = vadd.f32 %v1059, %v1083
        %v1086 = vadd.f32 %v1061, %v1084
        %v1087 = vpack.c.bf16 %v1086, %v1085
        %v1088 = vld [vmem:[#allocation4] sm:$0xf]
        %v1089 = vld [vmem:[#allocation4 + $0x4] sm:$0xf]
        %v1090 = vld [vmem:[#allocation4 + $0x8] sm:$0xf]
        %v1091 = vld [vmem:[#allocation4 + $0xc] sm:$0xf]
        %v1092 = vld [vmem:[#allocation4 + $0x10] sm:$0xf]
        %v1093 = vld [vmem:[#allocation4 + $0x14] sm:$0xf]
        %v1094 = vld [vmem:[#allocation4 + $0x18] sm:$0xf]
        %v1095 = vld [vmem:[#allocation4 + $0x1c] sm:$0xf]
        %v1096 = vld [vmem:[#allocation6] sm:$0x1]
        %v1098 = vperm.slane %v1096, 0
        %v1108 = vunpack.c.l.b16 %v1088
        %v1109 = vunpack.c.l.b16 %v1089
        %v1110 = vunpack.c.l.b16 %v1090
        %v1111 = vunpack.c.l.b16 %v1091
        %v1112 = vunpack.c.l.b16 %v1092
        %v1113 = vunpack.c.l.b16 %v1093
        %v1114 = vunpack.c.l.b16 %v1094
        %v1115 = vunpack.c.l.b16 %v1095
        %v1116 = vpack.c.b16 %v1109, %v1108
        %v1117 = vpack.c.b16 %v1111, %v1110
        %v1118 = vpack.c.b16 %v1113, %v1112
        %v1119 = vpack.c.b16 %v1115, %v1114
        %vm1124 = vcmask 523264
        %v1126 = vsel %vm1124, %v1087, 0
        %1128 = vmatpush.bf16.msra.mxu0 0
        %1129 = vmatpush.bf16.msra.mxu0 0
        %1130 = vmatpush.bf16.msra.mxu0 0
        %1131 = vmatpush.bf16.msra.mxu0 0
        %1132 = vmatpush.bf16.msra.mxu0 %v1119
        %1133 = vmatpush.bf16.msra.mxu0 %v1118
        %1134 = vmatpush.bf16.msra.mxu0 %v1117
        %1135 = vmatpush.bf16.msra.mxu0 %v1116
        %1136 = vmatmul.bf16.gmra.mxu0 %v1126
        %v1137 = vpop.f32.mrf.mxu0
        %v1138 = vadd.f32 %v1098, %v1137
        %v1139 = vpop.f32.mrf.mxu0
        %v1140 = vadd.f32 %v1098, %v1139
        %1141 = vdwg.mxu0
        %v1142 = vmul.f32 %v1138, 0.5
        %v1143 = vmul.f32 %v1140, 0.5
        %v1144 = vmul.f32 %v1138, 0.70710677
        %v1145 = vmul.f32 %v1140, 0.70710677
        %v1146 = vmul.f32 %v1144, %v1144
        %v1147 = vmin.f32 16.0, %v1146
        %v1148 = vmul.f32 %v1147, 2.1237322e-06
        %v1149 = vadd.f32 %v1148, 0.00028619796
        %v1150 = vmul.f32 %v1147, %v1149
        %v1151 = vadd.f32 %v1150, 0.0036580483
        %v1152 = vmul.f32 %v1147, %v1151
        %v1153 = vadd.f32 %v1152, 0.05243302
        %v1154 = vmul.f32 %v1147, %v1153
        %v1155 = vadd.f32 %v1154, 0.18741608
        %v1156 = vmul.f32 %v1147, %v1155
        %v1157 = vadd.f32 %v1156, 1.1283791
        %v1158 = vmul.f32 %v1144, %v1157
        %v1159 = vmul.f32 %v1147, 3.8918573e-05
        %v1160 = vadd.f32 %v1159, 0.001143296
        %v1161 = vmul.f32 %v1147, %v1160
        %v1162 = vadd.f32 %v1161, 0.014752088
        %v1163 = vmul.f32 %v1147, %v1162
        %v1164 = vadd.f32 %v1163, 0.112945676
        %v1165 = vmul.f32 %v1147, %v1164
        %v1166 = vadd.f32 %v1165, 0.4994258
        %v1167 = vmul.f32 %v1147, %v1166
        %v1168 = vadd.f32 %v1167, 1.0
        %v1169 = vrcp.pop %v1168
        %v1170 = vmul.f32 %v1168, %v1169
        %v1171 = vsub.f32 1.0, %v1170
        %v1172 = vmul.f32 %v1169, %v1171
        %v1173 = vadd.f32 %v1169, %v1172
        %vm1174 = vweird.f32 %v1168
        %vm1175 = vweird.f32 %v1169
        %vm1176 = vmor %vm1174, %vm1175
        %v1177 = vsel %vm1176, %v1169, %v1173
        %v1178 = vand.u32 2147483647, %v1168
        %vm1179 = vcmp.eq.f32.partialorder %v1178, 8.507059e+37
        %v1180 = vand.u32 %v1168, 2147483648
        %v1181 = vor.u32 1.1754944e-38, %v1180
        %v1182 = vsel %vm1179, %v1181, %v1177
        %v1183 = vmul.f32 %v1158, %v1182
        %v1184 = vmin.f32 %v1183, 1.0
        %v1185 = vmax.f32 %v1184, -1.0
        %v1186 = vmul.f32 %v1145, %v1145
        %v1187 = vmin.f32 16.0, %v1186
        %v1188 = vmul.f32 %v1187, 2.1237322e-06
        %v1189 = vadd.f32 %v1188, 0.00028619796
        %v1190 = vmul.f32 %v1187, %v1189
        %v1191 = vadd.f32 %v1190, 0.0036580483
        %v1192 = vmul.f32 %v1187, %v1191
        %v1193 = vadd.f32 %v1192, 0.05243302
        %v1194 = vmul.f32 %v1187, %v1193
        %v1195 = vadd.f32 %v1194, 0.18741608
        %v1196 = vmul.f32 %v1187, %v1195
        %v1197 = vadd.f32 %v1196, 1.1283791
        %v1198 = vmul.f32 %v1145, %v1197
        %v1199 = vmul.f32 %v1187, 3.8918573e-05
        %v1200 = vadd.f32 %v1199, 0.001143296
        %v1201 = vmul.f32 %v1187, %v1200
        %v1202 = vadd.f32 %v1201, 0.014752088
        %v1203 = vmul.f32 %v1187, %v1202
        %v1204 = vadd.f32 %v1203, 0.112945676
        %v1205 = vmul.f32 %v1187, %v1204
        %v1206 = vadd.f32 %v1205, 0.4994258
        %v1207 = vmul.f32 %v1187, %v1206
        %v1208 = vadd.f32 %v1207, 1.0
        %v1209 = vrcp.pop %v1208
        %v1210 = vmul.f32 %v1208, %v1209
        %v1211 = vsub.f32 1.0, %v1210
        %v1212 = vmul.f32 %v1209, %v1211
        %v1213 = vadd.f32 %v1209, %v1212
        %vm1214 = vweird.f32 %v1208
        %vm1215 = vweird.f32 %v1209
        %vm1216 = vmor %vm1214, %vm1215
        %v1217 = vsel %vm1216, %v1209, %v1213
        %v1218 = vand.u32 2147483647, %v1208
        %vm1219 = vcmp.eq.f32.partialorder %v1218, 8.507059e+37
        %v1220 = vand.u32 %v1208, 2147483648
        %v1221 = vor.u32 1.1754944e-38, %v1220
        %v1222 = vsel %vm1219, %v1221, %v1217
        %v1223 = vmul.f32 %v1198, %v1222
        %v1224 = vmin.f32 %v1223, 1.0
        %v1225 = vmax.f32 %v1224, -1.0
        %v1226 = vadd.f32 %v1185, 1.0
        %v1227 = vadd.f32 %v1225, 1.0
        %v1228 = vmul.f32 %v1142, %v1226
        %v1229 = vmul.f32 %v1143, %v1227
        %v1230 = vpack.c.bf16 %v1229, %v1228
        %v1231 = vld [vmem:[#allocation7] sm:$0xf]
        %v1232 = vld [vmem:[#allocation7 + $0x4] sm:$0xf]
        %v1233 = vld [vmem:[#allocation7 + $0x8] sm:$0xf]
        %v1234 = vld [vmem:[#allocation7 + $0xc] sm:$0xf]
        %v1235 = vld [vmem:[#allocation7 + $0x10] sm:$0xf]
        %v1236 = vld [vmem:[#allocation7 + $0x14] sm:$0xf]
        %v1237 = vld [vmem:[#allocation7 + $0x18] sm:$0xf]
        %v1238 = vld [vmem:[#allocation7 + $0x1c] sm:$0xf]
        %v1239 = vld [vmem:[#allocation7 + $0x20] sm:$0xf]
        %v1240 = vld [vmem:[#allocation7 + $0x24] sm:$0xf]
        %v1241 = vld [vmem:[#allocation7 + $0x28] sm:$0xf]
        %v1242 = vld [vmem:[#allocation7 + $0x2c] sm:$0xf]
        %v1243 = vld [vmem:[#allocation7 + $0x30] sm:$0xf]
        %v1244 = vld [vmem:[#allocation7 + $0x34] sm:$0xf]
        %v1245 = vld [vmem:[#allocation7 + $0x38] sm:$0xf]
        %v1246 = vld [vmem:[#allocation7 + $0x3c] sm:$0xf]
        %v1247 = vld [vmem:[#allocation9] sm:$0x1]
        %v1249 = vperm.slane %v1247, 0
        %v1267 = vunpack.c.l.b16 %v1231
        %v1268 = vunpack.c.l.b16 %v1232
        %v1269 = vunpack.c.l.b16 %v1233
        %v1270 = vunpack.c.l.b16 %v1234
        %v1271 = vunpack.c.l.b16 %v1235
        %v1272 = vunpack.c.l.b16 %v1236
        %v1273 = vunpack.c.l.b16 %v1237
        %v1274 = vunpack.c.l.b16 %v1238
        %v1275 = vunpack.c.l.b16 %v1239
        %v1276 = vunpack.c.l.b16 %v1240
        %v1277 = vunpack.c.l.b16 %v1241
        %v1278 = vunpack.c.l.b16 %v1242
        %v1279 = vunpack.c.l.b16 %v1243
        %v1280 = vunpack.c.l.b16 %v1244
        %v1281 = vunpack.c.l.b16 %v1245
        %v1282 = vunpack.c.l.b16 %v1246
        %v1283 = vpack.c.b16 %v1268, %v1267
        %v1284 = vpack.c.b16 %v1270, %v1269
        %v1285 = vpack.c.b16 %v1272, %v1271
        %v1286 = vpack.c.b16 %v1274, %v1273
        %v1287 = vpack.c.b16 %v1276, %v1275
        %v1288 = vpack.c.b16 %v1278, %v1277
        %v1289 = vpack.c.b16 %v1280, %v1279
        %v1290 = vpack.c.b16 %v1282, %v1281
        %1299 = vmatpush.bf16.msra.mxu0 %v1290
        %1300 = vmatpush.bf16.msra.mxu0 %v1289
        %1301 = vmatpush.bf16.msra.mxu0 %v1288
        %1302 = vmatpush.bf16.msra.mxu0 %v1287
        %1303 = vmatpush.bf16.msra.mxu0 %v1286
        %1304 = vmatpush.bf16.msra.mxu0 %v1285
        %1305 = vmatpush.bf16.msra.mxu0 %v1284
        %1306 = vmatpush.bf16.msra.mxu0 %v1283
        %1307 = vmatmul.bf16.gmra.mxu0 %v1230
        %v1308 = vpop.f32.mrf.mxu0
        %v1309 = vadd.f32 %v1249, %v1308
        %v1310 = vpop.f32.mrf.mxu0
        %v1311 = vadd.f32 %v1249, %v1310
        %1312 = vdwg.mxu0
        %v1313 = vmul.f32 %v1309, 0.5
        %v1314 = vmul.f32 %v1311, 0.5
        %v1315 = vmul.f32 %v1309, 0.70710677
        %v1316 = vmul.f32 %v1311, 0.70710677
        %v1317 = vmul.f32 %v1315, %v1315
        %v1318 = vmin.f32 16.0, %v1317
        %v1319 = vmul.f32 %v1318, 2.1237322e-06
        %v1320 = vadd.f32 %v1319, 0.00028619796
        %v1321 = vmul.f32 %v1318, %v1320
        %v1322 = vadd.f32 %v1321, 0.0036580483
        %v1323 = vmul.f32 %v1318, %v1322
        %v1324 = vadd.f32 %v1323, 0.05243302
        %v1325 = vmul.f32 %v1318, %v1324
        %v1326 = vadd.f32 %v1325, 0.18741608
        %v1327 = vmul.f32 %v1318, %v1326
        %v1328 = vadd.f32 %v1327, 1.1283791
        %v1329 = vmul.f32 %v1315, %v1328
        %v1330 = vmul.f32 %v1318, 3.8918573e-05
        %v1331 = vadd.f32 %v1330, 0.001143296
        %v1332 = vmul.f32 %v1318, %v1331
        %v1333 = vadd.f32 %v1332, 0.014752088
        %v1334 = vmul.f32 %v1318, %v1333
        %v1335 = vadd.f32 %v1334, 0.112945676
        %v1336 = vmul.f32 %v1318, %v1335
        %v1337 = vadd.f32 %v1336, 0.4994258
        %v1338 = vmul.f32 %v1318, %v1337
        %v1339 = vadd.f32 %v1338, 1.0
        %v1340 = vrcp.pop %v1339
        %v1341 = vmul.f32 %v1339, %v1340
        %v1342 = vsub.f32 1.0, %v1341
        %v1343 = vmul.f32 %v1340, %v1342
        %v1344 = vadd.f32 %v1340, %v1343
        %vm1345 = vweird.f32 %v1339
        %vm1346 = vweird.f32 %v1340
        %vm1347 = vmor %vm1345, %vm1346
        %v1348 = vsel %vm1347, %v1340, %v1344
        %v1349 = vand.u32 2147483647, %v1339
        %vm1350 = vcmp.eq.f32.partialorder %v1349, 8.507059e+37
        %v1351 = vand.u32 %v1339, 2147483648
        %v1352 = vor.u32 1.1754944e-38, %v1351
        %v1353 = vsel %vm1350, %v1352, %v1348
        %v1354 = vmul.f32 %v1329, %v1353
        %v1355 = vmin.f32 %v1354, 1.0
        %v1356 = vmax.f32 %v1355, -1.0
        %v1357 = vmul.f32 %v1316, %v1316
        %v1358 = vmin.f32 16.0, %v1357
        %v1359 = vmul.f32 %v1358, 2.1237322e-06
        %v1360 = vadd.f32 %v1359, 0.00028619796
        %v1361 = vmul.f32 %v1358, %v1360
        %v1362 = vadd.f32 %v1361, 0.0036580483
        %v1363 = vmul.f32 %v1358, %v1362
        %v1364 = vadd.f32 %v1363, 0.05243302
        %v1365 = vmul.f32 %v1358, %v1364
        %v1366 = vadd.f32 %v1365, 0.18741608
        %v1367 = vmul.f32 %v1358, %v1366
        %v1368 = vadd.f32 %v1367, 1.1283791
        %v1369 = vmul.f32 %v1316, %v1368
        %v1370 = vmul.f32 %v1358, 3.8918573e-05
        %v1371 = vadd.f32 %v1370, 0.001143296
        %v1372 = vmul.f32 %v1358, %v1371
        %v1373 = vadd.f32 %v1372, 0.014752088
        %v1374 = vmul.f32 %v1358, %v1373
        %v1375 = vadd.f32 %v1374, 0.112945676
        %v1376 = vmul.f32 %v1358, %v1375
        %v1377 = vadd.f32 %v1376, 0.4994258
        %v1378 = vmul.f32 %v1358, %v1377
        %v1379 = vadd.f32 %v1378, 1.0
        %v1380 = vrcp.pop %v1379
        %v1381 = vmul.f32 %v1379, %v1380
        %v1382 = vsub.f32 1.0, %v1381
        %v1383 = vmul.f32 %v1380, %v1382
        %v1384 = vadd.f32 %v1380, %v1383
        %vm1385 = vweird.f32 %v1379
        %vm1386 = vweird.f32 %v1380
        %vm1387 = vmor %vm1385, %vm1386
        %v1388 = vsel %vm1387, %v1380, %v1384
        %v1389 = vand.u32 2147483647, %v1379
        %vm1390 = vcmp.eq.f32.partialorder %v1389, 8.507059e+37
        %v1391 = vand.u32 %v1379, 2147483648
        %v1392 = vor.u32 1.1754944e-38, %v1391
        %v1393 = vsel %vm1390, %v1392, %v1388
        %v1394 = vmul.f32 %v1369, %v1393
        %v1395 = vmin.f32 %v1394, 1.0
        %v1396 = vmax.f32 %v1395, -1.0
        %v1397 = vadd.f32 %v1356, 1.0
        %v1398 = vadd.f32 %v1396, 1.0
        %v1399 = vmul.f32 %v1313, %v1397
        %v1400 = vmul.f32 %v1314, %v1398
        %v1401 = vpack.c.bf16 %v1400, %v1399
        %v1402 = vld [vmem:[#allocation10] sm:$0xf]
        %v1403 = vld [vmem:[#allocation10 + $0x4] sm:$0xf]
        %v1404 = vld [vmem:[#allocation10 + $0x8] sm:$0xf]
        %v1405 = vld [vmem:[#allocation10 + $0xc] sm:$0xf]
        %v1406 = vld [vmem:[#allocation10 + $0x10] sm:$0xf]
        %v1407 = vld [vmem:[#allocation10 + $0x14] sm:$0xf]
        %v1408 = vld [vmem:[#allocation10 + $0x18] sm:$0xf]
        %v1409 = vld [vmem:[#allocation10 + $0x1c] sm:$0xf]
        %v1410 = vld [vmem:[#allocation10 + $0x20] sm:$0xf]
        %v1411 = vld [vmem:[#allocation10 + $0x24] sm:$0xf]
        %v1412 = vld [vmem:[#allocation10 + $0x28] sm:$0xf]
        %v1413 = vld [vmem:[#allocation10 + $0x2c] sm:$0xf]
        %v1414 = vld [vmem:[#allocation10 + $0x30] sm:$0xf]
        %v1415 = vld [vmem:[#allocation10 + $0x34] sm:$0xf]
        %v1416 = vld [vmem:[#allocation10 + $0x38] sm:$0xf]
        %v1417 = vld [vmem:[#allocation10 + $0x3c] sm:$0xf]
        %v1418 = vld [vmem:[%s13] sm:$0x1]
        %v1420 = vperm.slane %v1418, 0
        %v1438 = vunpack.c.l.b16 %v1402
        %v1439 = vunpack.c.l.b16 %v1403
        %v1440 = vunpack.c.l.b16 %v1404
        %v1441 = vunpack.c.l.b16 %v1405
        %v1442 = vunpack.c.l.b16 %v1406
        %v1443 = vunpack.c.l.b16 %v1407
        %v1444 = vunpack.c.l.b16 %v1408
        %v1445 = vunpack.c.l.b16 %v1409
        %v1446 = vunpack.c.l.b16 %v1410
        %v1447 = vunpack.c.l.b16 %v1411
        %v1448 = vunpack.c.l.b16 %v1412
        %v1449 = vunpack.c.l.b16 %v1413
        %v1450 = vunpack.c.l.b16 %v1414
        %v1451 = vunpack.c.l.b16 %v1415
        %v1452 = vunpack.c.l.b16 %v1416
        %v1453 = vunpack.c.l.b16 %v1417
        %v1454 = vpack.c.b16 %v1439, %v1438
        %v1455 = vpack.c.b16 %v1441, %v1440
        %v1456 = vpack.c.b16 %v1443, %v1442
        %v1457 = vpack.c.b16 %v1445, %v1444
        %v1458 = vpack.c.b16 %v1447, %v1446
        %v1459 = vpack.c.b16 %v1449, %v1448
        %v1460 = vpack.c.b16 %v1451, %v1450
        %v1461 = vpack.c.b16 %v1453, %v1452
        %1470 = vmatpush.bf16.msra.mxu0 %v1461
        %1471 = vmatpush.bf16.msra.mxu0 %v1460
        %1472 = vmatpush.bf16.msra.mxu0 %v1459
        %1473 = vmatpush.bf16.msra.mxu0 %v1458
        %1474 = vmatpush.bf16.msra.mxu0 %v1457
        %1475 = vmatpush.bf16.msra.mxu0 %v1456
        %1476 = vmatpush.bf16.msra.mxu0 %v1455
        %1477 = vmatpush.bf16.msra.mxu0 %v1454
        %1478 = vmatmul.bf16.gmra.mxu0 %v1401
        %v1479 = vpop.f32.mrf.mxu0
        %v1480 = vadd.f32 %v1420, %v1479
        %v1481 = vpop.f32.mrf.mxu0
        %v1482 = vadd.f32 %v1420, %v1481
        %1483 = vdwg.mxu0
        %v1484 = vpack.c.bf16 %v1480, %v1480
        %v1485 = vpack.c.bf16 %v1482, %v1482
        %1486 = vst [vmem:[%s622] sm:$0xf] %v1484
        %1487 = vst [vmem:[%s622 + $0x4] sm:$0xf] %v1485
        %s1488 = smul.u32 2, %s31
        %p1489 = scmp.lt.s32.totalorder %s1488, 3
        %s1490 = scalar_select %p1489, %s1488, 3
        %s1491 = smul.addr %s1490, 4
        %s1492 = scalar_lea.vmem %s14, %s1491
        %s1493 = smul.u32 2, %s31
        %p1494 = scmp.lt.s32.totalorder %s1493, 3
        %s1495 = scalar_select %p1494, %s1493, 3
        %s1496 = smul.addr %s1495, 8
        %s1497 = scalar_lea.vmem %s15, %s1496
        // Predicated region
        $region101: #{vae_forward.1} parent=75 // pred_check
          %p1498 = pneg %p353
        $region102: #{vae_forward.1} parent=75 // pred_check_branch
          %1500 = sbr.rel (%p1498) target = $region104
        $region103: #{vae_forward.1} parent=75 // pred_region
          %s1501 = smul.u32 2, %s31
        $region104: #{vae_forward.1} parent=75 // pred_fallthru
          _
        // Predicated region
        $region105: #{vae_forward.1} parent=75 // pred_check
          %p1502 = pneg %p379
        $region106: #{vae_forward.1} parent=75 // pred_check_branch
          %1504 = sbr.rel (%p1502) target = $region108
        $region107: #{vae_forward.1} parent=75 // pred_region
          %s1505 = smul.u32 2, %s31
        $region108: #{vae_forward.1} parent=75 // pred_fallthru
          _
      $region76: #{vae_forward.1} parent=5 // pred_fallthru
        _
      %p1506 = scmp.le.s32.totalorder 2, %s26
      // Predicated region
      $region109: #{vae_forward.1} parent=5 // pred_check
        %p1507 = pneg %p1506
      $region110: #{vae_forward.1} parent=5 // pred_check_branch
        %1509 = sbr.rel (%p1507) target = $region112
      $region111: #{vae_forward.1} parent=5 // pred_region
        %s1510 = ssub.s32 %s26, 2
        // Predicated region
        $region113: #{vae_forward.1} parent=111 // pred_check
          %p1511 = pneg %p359
        $region114: #{vae_forward.1} parent=111 // pred_check_branch
          %1513 = sbr.rel (%p1511) target = $region116
        $region115: #{vae_forward.1} parent=111 // pred_region
          %s1514 = smul.u32 2, %s32
          %p1515 = scmp.lt.s32.totalorder %s1514, 3
          %s1516 = scalar_select %p1515, %s1514, 3
          %s1517 = smul.addr %s1516, 4
          %s1518 = scalar_lea.vmem %s14, %s1517
        $region116: #{vae_forward.1} parent=111 // pred_fallthru
          _
        // Predicated region
        $region117: #{vae_forward.1} parent=111 // pred_check
          %p1519 = pneg %p385
        $region118: #{vae_forward.1} parent=111 // pred_check_branch
          %1521 = sbr.rel (%p1519) target = $region120
        $region119: #{vae_forward.1} parent=111 // pred_region
          %s1522 = smul.u32 2, %s32
          %p1523 = scmp.lt.s32.totalorder %s1522, 3
          %s1524 = scalar_select %p1523, %s1522, 3
          %s1525 = smul.addr %s1524, 8
          %s1526 = scalar_lea.vmem %s15, %s1525
        $region120: #{vae_forward.1} parent=111 // pred_fallthru
          _
      $region112: #{vae_forward.1} parent=5 // pred_fallthru
        _
    $region6: #{vae_forward.1} parent=1 // loop_footer
      %s30 = sadd.s32 1, %s26
    $region7: #{vae_forward.1} parent=1 // loop_footer_branch
      %25 = sbr.rel target = $region3
    $region8: #{vae_forward.1} parent=1 // loop_exit
      _
    %1527 = vsyncpa [#allocation3], 1
    %s1528 = scalar_lea.sflag [#allocation3], 1
    %1529 = vsyncpa %s1528, 1
    %1530 = vsyncpa [#allocation5], 1
    %1531 = vsyncpa [#allocation8], 1
    %1532 = vsyncpa [#allocation11], 1

</llo_original>
